<compile_context>
chip_gen: v7x
topology: tpu7x:2x2x1
jax: 0.10.0
libtpu: 0.0.40
codegen_flags: <defaults>
</compile_context>

<pallas_src>
import functools

import jax
import jax.numpy as jnp
from jax import lax
from jax.experimental import pallas as pl
from jax.experimental.pallas import tpu as pltpu


def _round_up(x, m):
    return ((x + m - 1) // m) * m


def _conv_bn_relu_kernel(x_ref, w_ref, shift_ref, o_ref, *, H, W, KH, KW,
                         use_roll):
    # x_ref:     (bn, Hp, Wp, Cin)   bf16  zero-padded NHWC input block
    # w_ref:     (KH*KW, Cout, Cin)  bf16  conv weights, BN scale folded in
    # shift_ref: (Cout, 1)           f32   folded BN shift (bias)
    # o_ref:     (bn, Cout, H*W)     NCHW-friendly, lane-dense output block
    bn = x_ref.shape[0]
    Wp = x_ref.shape[2]
    Cin = x_ref.shape[3]
    Cout = o_ref.shape[1]

    shift = shift_ref[...]                       # (Cout, 1), hoisted
    # (Cout,Cin) contracted with (H*W,Cin) on Cin  ->  (Cout, H*W)
    dims = (((1,), (1,)), ((), ()))

    for b in range(bn):                          # static unroll, bn is small
        xb = x_ref[b]                            # (Hp, Wp, Cin) bf16
        acc = jnp.zeros((Cout, H * W), jnp.float32)
        for kw in range(KW):
            x_kw, w0 = xb, kw
            if use_roll and kw > 0:
                # Shift the padded W (sublane) axis on the XLU so the tap
                # slice below starts at an aligned offset 0; the wrap-around
                # only touches the zero-pad columns, which are never read.
                x_kw, w0 = pltpu.roll(xb, Wp - kw, axis=1), 0
            for kh in range(KH):
                tap = x_kw[kh:kh + H, w0:w0 + W, :]     # (H, W, Cin)
                tap = tap.reshape(H * W, Cin)           # cheap when W % 8 == 0
                acc = acc + lax.dot_general(
                    w_ref[kh * KW + kw], tap, dims,
                    preferred_element_type=jnp.float32)
        # BN (eval) shift + ReLU epilogue, single lane-dense store per image.
        y = jnp.maximum(acc + shift, 0.0)
        o_ref[b] = y.astype(o_ref.dtype)


def conv_bn_relu_pallas(x_nchw, weight_oihw, gamma, beta, running_mean,
                        running_var, eps=1e-5, out_dtype=jnp.bfloat16):
    """Fused Conv2d(3x3, s=1, p=1, no bias) + BatchNorm2d(eval) + ReLU.

    x_nchw:      (N, Cin, H, W)      float32
    weight_oihw: (Cout, Cin, KH, KW) float32 (PyTorch layout)
    returns:     (N, Cout, H, W)     out_dtype (bf16 by default)
    """
    N, Cin, H, W = x_nchw.shape
    Cout, _, KH, KW = weight_oihw.shape
    ph, pw = KH // 2, KW // 2                    # "same" padding (module default)

    # ---- BN (eval) folding: scale into the weights, shift kept as a bias. ----
    scale = gamma / jnp.sqrt(running_var + eps)              # (Cout,)
    shift = (beta - running_mean * scale).astype(jnp.float32).reshape(Cout, 1)

    # OIHW -> (KH*KW, Cout, Cin); scale folded in f32, then cast to bf16.
    w_t = jnp.transpose(weight_oihw, (2, 3, 0, 1)) * scale[None, None, :, None]
    w_taps = w_t.reshape(KH * KW, Cout, Cin).astype(jnp.bfloat16)

    # NCHW -> NHWC (Cin on lanes); zero pad spatially.  The padded width is
    # rounded up to a multiple of 8 so the W (sublane) axis is tile-aligned
    # for the in-kernel roll/slice work.
    x_nhwc = jnp.transpose(x_nchw, (0, 2, 3, 1))
    Hp = H + 2 * ph
    Wp = _round_up(W + 2 * pw, 8)
    x_pad = jnp.pad(
        x_nhwc, ((0, 0), (ph, ph), (pw, Wp - W - pw), (0, 0))
    ).astype(jnp.bfloat16)

    # ---- Generation-aware VMEM accounting and batch-block sizing. ------------
    HW = H * W
    out_bytes = jnp.dtype(out_dtype).itemsize
    try:
        vmem_cap = int(pltpu.get_tpu_info().vmem_capacity_bytes)
    except Exception:                            # pragma: no cover
        vmem_cap = 128 * 1024 * 1024

    in_img = Hp * Wp * Cin * 2                   # bf16 input slab
    out_img = Cout * HW * out_bytes              # output slab in HBM dtype
    tmp_img = (2 * in_img                        # rolled input copies (kw=1,2)
               + 2 * HW * Cin * 2                # tap slab + reshape copy
               + 3 * Cout * HW * 4)              # f32 acc / dot result / epilogue
    per_img = 2 * in_img + 2 * out_img + tmp_img  # 2x = double-buffered I/O

    # ~3/8 of physical VMEM, capped at 28 MiB (v5e/v6e: 128 MiB -> 28 MiB,
    # v7x: 64 MiB -> 24 MiB).
    budget = min(vmem_cap * 3 // 8, 28 * 1024 * 1024)

    # Keep >= 2 parallel grid steps so both v7x TensorCores get work, and keep
    # the unrolled per-image loop in the kernel small.
    bn_cap = min(8, max(1, pl.cdiv(N, 2)))
    bn = int(max(1, min(bn_cap, budget // max(per_img, 1))))

    # Pad N up to a multiple of bn instead of shrinking bn to a divisor of N.
    n_pad = pl.cdiv(N, bn) * bn
    if n_pad != N:
        x_pad = jnp.pad(x_pad, ((0, n_pad - N), (0, 0), (0, 0), (0, 0)))

    w_bytes = 2 * (KH * KW * Cout * Cin * 2 + Cout * 4)
    vmem_limit = int(min(vmem_cap,
                         max(32 * 1024 * 1024,
                             (bn * per_img + w_bytes) * 5 // 4)))

    def build(use_roll):
        kernel = functools.partial(_conv_bn_relu_kernel, H=H, W=W, KH=KH,
                                   KW=KW, use_roll=use_roll)
        return pl.pallas_call(
            kernel,
            out_shape=jax.ShapeDtypeStruct((n_pad, Cout, HW), out_dtype),
            grid_spec=pltpu.PrefetchScalarGridSpec(
                num_scalar_prefetch=0,
                grid=(n_pad // bn,),
                in_specs=[
                    pl.BlockSpec((bn, Hp, Wp, Cin), lambda n: (n, 0, 0, 0)),
                    pl.BlockSpec((KH * KW, Cout, Cin), lambda n: (0, 0, 0)),
                    pl.BlockSpec((Cout, 1), lambda n: (0, 0)),
                ],
                out_specs=pl.BlockSpec((bn, Cout, HW), lambda n: (n, 0, 0)),
            ),
            compiler_params=pltpu.CompilerParams(
                dimension_semantics=("parallel",),
                vmem_limit_bytes=vmem_limit),
        )

    try:
        out_flat = build(use_roll=True)(x_pad, w_taps, shift)
    except Exception:
        # Belt-and-braces: identical math with plain (unaligned) kw slices if
        # the sublane-roll path ever fails to lower on this backend.
        out_flat = build(use_roll=False)(x_pad, w_taps, shift)

    # (N, Cout, H*W) -> (N, Cout, H, W) is a contiguous, metadata-only reshape.
    out = out_flat.reshape(n_pad, Cout, H, W)
    return out[:N] if n_pad != N else out


def _reference(x_nchw, weight_oihw, gamma, beta, mean, var, eps=1e-5):
    # Plain-JAX (f32) reference for the sanity check.
    y = lax.conv_general_dilated(
        x_nchw, weight_oihw, window_strides=(1, 1), padding=((1, 1), (1, 1)),
        dimension_numbers=("NCHW", "OIHW", "NCHW"))
    scale = gamma / jnp.sqrt(var + eps)
    shift = beta - mean * scale
    y = y * scale[None, :, None, None] + shift[None, :, None, None]
    return jnp.maximum(y, 0.0)


if __name__ == "__main__":
    key = jax.random.PRNGKey(0)
    N, Cin, Cout, H, W = 2, 4, 8, 16, 16
    k_x, k_w, k_g, k_b, k_m, k_v = jax.random.split(key, 6)

    x = jax.random.normal(k_x, (N, Cin, H, W), dtype=jnp.float32)
    # Conv2d(in=4, out=8, kernel=3, stride=1, pad=1, bias=False) weight.
    weight = jax.random.normal(k_w, (Cout, Cin, 3, 3), dtype=jnp.float32) * 0.1
    # BatchNorm2d(out_channels) parameters / running stats (eval-mode).
    gamma = 1.0 + 0.1 * jax.random.normal(k_g, (Cout,), dtype=jnp.float32)
    beta = 0.1 * jax.random.normal(k_b, (Cout,), dtype=jnp.float32)
    running_mean = 0.1 * jax.random.normal(k_m, (Cout,), dtype=jnp.float32)
    running_var = jnp.abs(1.0 + 0.1 * jax.random.normal(k_v, (Cout,),
                                                        dtype=jnp.float32))

    out = conv_bn_relu_pallas(x, weight, gamma, beta, running_mean, running_var)
    out = jax.block_until_ready(out)

    ref = _reference(x, weight, gamma, beta, running_mean, running_var)
    assert out.shape == (N, Cout, H, W)
    # bf16 inputs / scale-folded bf16 weights / bf16 output (f32 accumulation).
    assert jnp.allclose(out.astype(jnp.float32), ref, atol=5e-2, rtol=5e-2), \
        "mismatch vs reference"

    print("KERNEL_OK")
</pallas_src>

<mosaic_0001>
module attributes {stable_mosaic.version = 11 : i64} {
  func.func @_conv_bn_relu_kernel(%arg0: i32, %arg1: memref<1x18x24x4xbf16, #tpu.memory_space<vmem>>, %arg2: memref<9x8x4xbf16, #tpu.memory_space<vmem>>, %arg3: memref<8x1xf32, #tpu.memory_space<vmem>>, %arg4: memref<1x8x256xbf16, #tpu.memory_space<vmem>>) attributes {dimension_semantics = [#tpu.dimension_semantics<parallel>], iteration_bounds = array<i64: 2>, scalar_prefetch = 0 : i64, scratch_operands = 0 : i64, tpu.core_type = #tpu.core_type<tc>, window_params = [{transform_indices = @transform_0, window_bounds = array<i64: 1, 18, 24, 4>}, {pipeline_mode = #tpu.pipeline_mode<synchronous>, transform_indices = @transform_1, window_bounds = array<i64: 9, 8, 4>}, {pipeline_mode = #tpu.pipeline_mode<synchronous>, transform_indices = @transform_2, window_bounds = array<i64: 8, 1>}, {transform_indices = @transform_3, window_bounds = array<i64: 1, 8, 256>}]} {
    %c0 = arith.constant 0 : index
    %c0_0 = arith.constant 0 : index
    %0 = vector.load %arg3[%c0, %c0_0] : memref<8x1xf32, #tpu.memory_space<vmem>>, vector<8x1xf32>
    %c0_1 = arith.constant 0 : index
    %c0_2 = arith.constant 0 : index
    %c0_3 = arith.constant 0 : index
    %c0_4 = arith.constant 0 : index
    %1 = vector.load %arg1[%c0_1, %c0_2, %c0_3, %c0_4] : memref<1x18x24x4xbf16, #tpu.memory_space<vmem>>, vector<1x18x24x4xbf16>
    %2 = vector.shape_cast %1 : vector<1x18x24x4xbf16> to vector<18x24x4xbf16>
    %cst = arith.constant 0.000000e+00 : f32
    %3 = vector.broadcast %cst : f32 to vector<8x256xf32>
    %4 = vector.extract_strided_slice %2 {offsets = [0, 0, 0], sizes = [16, 16, 4], strides = [1, 1, 1]} : vector<18x24x4xbf16> to vector<16x16x4xbf16>
    %5 = vector.shape_cast %4 : vector<16x16x4xbf16> to vector<256x4xbf16>
    %c0_5 = arith.constant 0 : index
    %c0_6 = arith.constant 0 : index
    %c0_7 = arith.constant 0 : index
    %6 = vector.load %arg2[%c0_5, %c0_6, %c0_7] : memref<9x8x4xbf16, #tpu.memory_space<vmem>>, vector<1x8x4xbf16>
    %7 = vector.shape_cast %6 : vector<1x8x4xbf16> to vector<8x4xbf16>
    %cst_8 = arith.constant dense<0.000000e+00> : vector<8x256xf32>
    %8 = tpu.matmul %7, %5, %cst_8 {dimension_numbers = #tpu.dot_dimension_numbers<[1], [1], [0], [0], [0, 0, 1, 0], [], []>} : vector<8x4xbf16>, vector<256x4xbf16>, vector<8x256xf32> -> vector<8x256xf32>
    %9 = arith.addf %3, %8 : vector<8x256xf32>
    %10 = vector.extract_strided_slice %2 {offsets = [1, 0, 0], sizes = [16, 16, 4], strides = [1, 1, 1]} : vector<18x24x4xbf16> to vector<16x16x4xbf16>
    %11 = vector.shape_cast %10 : vector<16x16x4xbf16> to vector<256x4xbf16>
    %c3 = arith.constant 3 : index
    %c0_9 = arith.constant 0 : index
    %c0_10 = arith.constant 0 : index
    %12 = vector.load %arg2[%c3, %c0_9, %c0_10] : memref<9x8x4xbf16, #tpu.memory_space<vmem>>, vector<1x8x4xbf16>
    %13 = vector.shape_cast %12 : vector<1x8x4xbf16> to vector<8x4xbf16>
    %cst_11 = arith.constant dense<0.000000e+00> : vector<8x256xf32>
    %14 = tpu.matmul %13, %11, %cst_11 {dimension_numbers = #tpu.dot_dimension_numbers<[1], [1], [0], [0], [0, 0, 1, 0], [], []>} : vector<8x4xbf16>, vector<256x4xbf16>, vector<8x256xf32> -> vector<8x256xf32>
    %15 = arith.addf %9, %14 : vector<8x256xf32>
    %16 = vector.extract_strided_slice %2 {offsets = [2, 0, 0], sizes = [16, 16, 4], strides = [1, 1, 1]} : vector<18x24x4xbf16> to vector<16x16x4xbf16>
    %17 = vector.shape_cast %16 : vector<16x16x4xbf16> to vector<256x4xbf16>
    %c6 = arith.constant 6 : index
    %c0_12 = arith.constant 0 : index
    %c0_13 = arith.constant 0 : index
    %18 = vector.load %arg2[%c6, %c0_12, %c0_13] : memref<9x8x4xbf16, #tpu.memory_space<vmem>>, vector<1x8x4xbf16>
    %19 = vector.shape_cast %18 : vector<1x8x4xbf16> to vector<8x4xbf16>
    %cst_14 = arith.constant dense<0.000000e+00> : vector<8x256xf32>
    %20 = tpu.matmul %19, %17, %cst_14 {dimension_numbers = #tpu.dot_dimension_numbers<[1], [1], [0], [0], [0, 0, 1, 0], [], []>} : vector<8x4xbf16>, vector<256x4xbf16>, vector<8x256xf32> -> vector<8x256xf32>
    %21 = arith.addf %15, %20 : vector<8x256xf32>
    %c23_i32 = arith.constant 23 : i32
    %22 = tpu.dynamic_rotate %2 by %c23_i32 dim 1 : vector<18x24x4xbf16>, i32 -> vector<18x24x4xbf16>
    %23 = vector.extract_strided_slice %22 {offsets = [0, 0, 0], sizes = [16, 16, 4], strides = [1, 1, 1]} : vector<18x24x4xbf16> to vector<16x16x4xbf16>
    %24 = vector.shape_cast %23 : vector<16x16x4xbf16> to vector<256x4xbf16>
    %c1 = arith.constant 1 : index
    %c0_15 = arith.constant 0 : index
    %c0_16 = arith.constant 0 : index
    %25 = vector.load %arg2[%c1, %c0_15, %c0_16] : memref<9x8x4xbf16, #tpu.memory_space<vmem>>, vector<1x8x4xbf16>
    %26 = vector.shape_cast %25 : vector<1x8x4xbf16> to vector<8x4xbf16>
    %cst_17 = arith.constant dense<0.000000e+00> : vector<8x256xf32>
    %27 = tpu.matmul %26, %24, %cst_17 {dimension_numbers = #tpu.dot_dimension_numbers<[1], [1], [0], [0], [0, 0, 1, 0], [], []>} : vector<8x4xbf16>, vector<256x4xbf16>, vector<8x256xf32> -> vector<8x256xf32>
    %28 = arith.addf %21, %27 : vector<8x256xf32>
    %29 = vector.extract_strided_slice %22 {offsets = [1, 0, 0], sizes = [16, 16, 4], strides = [1, 1, 1]} : vector<18x24x4xbf16> to vector<16x16x4xbf16>
    %30 = vector.shape_cast %29 : vector<16x16x4xbf16> to vector<256x4xbf16>
    %c4 = arith.constant 4 : index
    %c0_18 = arith.constant 0 : index
    %c0_19 = arith.constant 0 : index
    %31 = vector.load %arg2[%c4, %c0_18, %c0_19] : memref<9x8x4xbf16, #tpu.memory_space<vmem>>, vector<1x8x4xbf16>
    %32 = vector.shape_cast %31 : vector<1x8x4xbf16> to vector<8x4xbf16>
    %cst_20 = arith.constant dense<0.000000e+00> : vector<8x256xf32>
    %33 = tpu.matmul %32, %30, %cst_20 {dimension_numbers = #tpu.dot_dimension_numbers<[1], [1], [0], [0], [0, 0, 1, 0], [], []>} : vector<8x4xbf16>, vector<256x4xbf16>, vector<8x256xf32> -> vector<8x256xf32>
    %34 = arith.addf %28, %33 : vector<8x256xf32>
    %35 = vector.extract_strided_slice %22 {offsets = [2, 0, 0], sizes = [16, 16, 4], strides = [1, 1, 1]} : vector<18x24x4xbf16> to vector<16x16x4xbf16>
    %36 = vector.shape_cast %35 : vector<16x16x4xbf16> to vector<256x4xbf16>
    %c7 = arith.constant 7 : index
    %c0_21 = arith.constant 0 : index
    %c0_22 = arith.constant 0 : index
    %37 = vector.load %arg2[%c7, %c0_21, %c0_22] : memref<9x8x4xbf16, #tpu.memory_space<vmem>>, vector<1x8x4xbf16>
    %38 = vector.shape_cast %37 : vector<1x8x4xbf16> to vector<8x4xbf16>
    %cst_23 = arith.constant dense<0.000000e+00> : vector<8x256xf32>
    %39 = tpu.matmul %38, %36, %cst_23 {dimension_numbers = #tpu.dot_dimension_numbers<[1], [1], [0], [0], [0, 0, 1, 0], [], []>} : vector<8x4xbf16>, vector<256x4xbf16>, vector<8x256xf32> -> vector<8x256xf32>
    %40 = arith.addf %34, %39 : vector<8x256xf32>
    %c22_i32 = arith.constant 22 : i32
    %41 = tpu.dynamic_rotate %2 by %c22_i32 dim 1 : vector<18x24x4xbf16>, i32 -> vector<18x24x4xbf16>
    %42 = vector.extract_strided_slice %41 {offsets = [0, 0, 0], sizes = [16, 16, 4], strides = [1, 1, 1]} : vector<18x24x4xbf16> to vector<16x16x4xbf16>
    %43 = vector.shape_cast %42 : vector<16x16x4xbf16> to vector<256x4xbf16>
    %c2 = arith.constant 2 : index
    %c0_24 = arith.constant 0 : index
    %c0_25 = arith.constant 0 : index
    %44 = vector.load %arg2[%c2, %c0_24, %c0_25] : memref<9x8x4xbf16, #tpu.memory_space<vmem>>, vector<1x8x4xbf16>
    %45 = vector.shape_cast %44 : vector<1x8x4xbf16> to vector<8x4xbf16>
    %cst_26 = arith.constant dense<0.000000e+00> : vector<8x256xf32>
    %46 = tpu.matmul %45, %43, %cst_26 {dimension_numbers = #tpu.dot_dimension_numbers<[1], [1], [0], [0], [0, 0, 1, 0], [], []>} : vector<8x4xbf16>, vector<256x4xbf16>, vector<8x256xf32> -> vector<8x256xf32>
    %47 = arith.addf %40, %46 : vector<8x256xf32>
    %48 = vector.extract_strided_slice %41 {offsets = [1, 0, 0], sizes = [16, 16, 4], strides = [1, 1, 1]} : vector<18x24x4xbf16> to vector<16x16x4xbf16>
    %49 = vector.shape_cast %48 : vector<16x16x4xbf16> to vector<256x4xbf16>
    %c5 = arith.constant 5 : index
    %c0_27 = arith.constant 0 : index
    %c0_28 = arith.constant 0 : index
    %50 = vector.load %arg2[%c5, %c0_27, %c0_28] : memref<9x8x4xbf16, #tpu.memory_space<vmem>>, vector<1x8x4xbf16>
    %51 = vector.shape_cast %50 : vector<1x8x4xbf16> to vector<8x4xbf16>
    %cst_29 = arith.constant dense<0.000000e+00> : vector<8x256xf32>
    %52 = tpu.matmul %51, %49, %cst_29 {dimension_numbers = #tpu.dot_dimension_numbers<[1], [1], [0], [0], [0, 0, 1, 0], [], []>} : vector<8x4xbf16>, vector<256x4xbf16>, vector<8x256xf32> -> vector<8x256xf32>
    %53 = arith.addf %47, %52 : vector<8x256xf32>
    %54 = vector.extract_strided_slice %41 {offsets = [2, 0, 0], sizes = [16, 16, 4], strides = [1, 1, 1]} : vector<18x24x4xbf16> to vector<16x16x4xbf16>
    %55 = vector.shape_cast %54 : vector<16x16x4xbf16> to vector<256x4xbf16>
    %c8 = arith.constant 8 : index
    %c0_30 = arith.constant 0 : index
    %c0_31 = arith.constant 0 : index
    %56 = vector.load %arg2[%c8, %c0_30, %c0_31] : memref<9x8x4xbf16, #tpu.memory_space<vmem>>, vector<1x8x4xbf16>
    %57 = vector.shape_cast %56 : vector<1x8x4xbf16> to vector<8x4xbf16>
    %cst_32 = arith.constant dense<0.000000e+00> : vector<8x256xf32>
    %58 = tpu.matmul %57, %55, %cst_32 {dimension_numbers = #tpu.dot_dimension_numbers<[1], [1], [0], [0], [0, 0, 1, 0], [], []>} : vector<8x4xbf16>, vector<256x4xbf16>, vector<8x256xf32> -> vector<8x256xf32>
    %59 = arith.addf %53, %58 : vector<8x256xf32>
    %60 = vector.broadcast %0 : vector<8x1xf32> to vector<8x256xf32>
    %61 = arith.addf %59, %60 : vector<8x256xf32>
    %cst_33 = arith.constant 0.000000e+00 : f32
    %62 = vector.broadcast %cst_33 : f32 to vector<8x256xf32>
    %63 = arith.maximumf %61, %62 : vector<8x256xf32>
    %64 = arith.truncf %63 : vector<8x256xf32> to vector<8x256xbf16>
    %c0_34 = arith.constant 0 : index
    %c0_35 = arith.constant 0 : index
    %c0_36 = arith.constant 0 : index
    %65 = vector.load %arg4[%c0_34, %c0_35, %c0_36] : memref<1x8x256xbf16, #tpu.memory_space<vmem>>, vector<1x8x256xbf16>
    %66 = vector.shape_cast %65 : vector<1x8x256xbf16> to vector<8x256xbf16>
    %67 = vector.shape_cast %64 : vector<8x256xbf16> to vector<1x8x256xbf16>
    tpu.vector_store %arg4[%c0_34, %c0_35, %c0_36], %67 {strides = array<i32>} : memref<1x8x256xbf16, #tpu.memory_space<vmem>>, vector<1x8x256xbf16>,
    return
  }
  func.func @transform_0(%arg0: i32) -> (i32, i32, i32, i32) {
    %c0_i32 = arith.constant 0 : i32
    %c0_i32_0 = arith.constant 0 : i32
    %c0_i32_1 = arith.constant 0 : i32
    %c0_i32_2 = arith.constant 0 : i32
    return %arg0, %c0_i32, %c0_i32_0, %c0_i32_1 : i32, i32, i32, i32
  }
  func.func @transform_1(%arg0: i32) -> (i32, i32, i32) {
    %c0_i32 = arith.constant 0 : i32
    %c0_i32_0 = arith.constant 0 : i32
    %c0_i32_1 = arith.constant 0 : i32
    %c0_i32_2 = arith.constant 0 : i32
    return %c0_i32, %c0_i32_0, %c0_i32_1 : i32, i32, i32
  }
  func.func @transform_2(%arg0: i32) -> (i32, i32) {
    %c0_i32 = arith.constant 0 : i32
    %c0_i32_0 = arith.constant 0 : i32
    %c0_i32_1 = arith.constant 0 : i32
    return %c0_i32, %c0_i32_0 : i32, i32
  }
  func.func @transform_3(%arg0: i32) -> (i32, i32, i32) {
    %c0_i32 = arith.constant 0 : i32
    %c0_i32_0 = arith.constant 0 : i32
    %c0_i32_1 = arith.constant 0 : i32
    return %arg0, %c0_i32, %c0_i32_0 : i32, i32, i32
  }
}

module attributes {stable_mosaic.version = 11 : i64} {
  func.func @_conv_bn_relu_kernel(%arg0: i32, %arg1: memref<1x18x24x4xbf16, #tpu.memory_space<vmem>>, %arg2: memref<9x8x4xbf16, #tpu.memory_space<vmem>>, %arg3: memref<8x1xf32, #tpu.memory_space<vmem>>, %arg4: memref<1x8x256xbf16, #tpu.memory_space<vmem>>) attributes {dimension_semantics = [#tpu.dimension_semantics<parallel>], iteration_bounds = array<i64: 2>, scalar_prefetch = 0 : i64, scratch_operands = 0 : i64, tpu.core_type = #tpu.core_type<tc>, window_params = [{transform_indices = @transform_0, window_bounds = array<i64: 1, 18, 24, 4>}, {pipeline_mode = #tpu.pipeline_mode<synchronous>, transform_indices = @transform_1, window_bounds = array<i64: 9, 8, 4>}, {pipeline_mode = #tpu.pipeline_mode<synchronous>, transform_indices = @transform_2, window_bounds = array<i64: 8, 1>}, {transform_indices = @transform_3, window_bounds = array<i64: 1, 8, 256>}]} {
    %c0 = arith.constant 0 : index
    %c0_0 = arith.constant 0 : index
    %0 = vector.load %arg3[%c0, %c0_0] : memref<8x1xf32, #tpu.memory_space<vmem>>, vector<8x1xf32>
    %c0_1 = arith.constant 0 : index
    %c0_2 = arith.constant 0 : index
    %c0_3 = arith.constant 0 : index
    %c0_4 = arith.constant 0 : index
    %1 = vector.load %arg1[%c0_1, %c0_2, %c0_3, %c0_4] : memref<1x18x24x4xbf16, #tpu.memory_space<vmem>>, vector<1x18x24x4xbf16>
    %2 = vector.shape_cast %1 : vector<1x18x24x4xbf16> to vector<18x24x4xbf16>
    %cst = arith.constant 0.000000e+00 : f32
    %3 = vector.broadcast %cst : f32 to vector<8x256xf32>
    %4 = vector.extract_strided_slice %2 {offsets = [0, 0, 0], sizes = [16, 16, 4], strides = [1, 1, 1]} : vector<18x24x4xbf16> to vector<16x16x4xbf16>
    %5 = vector.shape_cast %4 : vector<16x16x4xbf16> to vector<256x4xbf16>
    %c0_5 = arith.constant 0 : index
    %c0_6 = arith.constant 0 : index
    %c0_7 = arith.constant 0 : index
    %6 = vector.load %arg2[%c0_5, %c0_6, %c0_7] : memref<9x8x4xbf16, #tpu.memory_space<vmem>>, vector<1x8x4xbf16>
    %7 = vector.shape_cast %6 : vector<1x8x4xbf16> to vector<8x4xbf16>
    %cst_8 = arith.constant dense<0.000000e+00> : vector<8x256xf32>
    %8 = tpu.matmul %7, %5, %cst_8 {dimension_numbers = #tpu.dot_dimension_numbers<[1], [1], [0], [0], [0, 0, 1, 0], [], []>} : vector<8x4xbf16>, vector<256x4xbf16>, vector<8x256xf32> -> vector<8x256xf32>
    %9 = arith.addf %3, %8 : vector<8x256xf32>
    %10 = vector.extract_strided_slice %2 {offsets = [1, 0, 0], sizes = [16, 16, 4], strides = [1, 1, 1]} : vector<18x24x4xbf16> to vector<16x16x4xbf16>
    %11 = vector.shape_cast %10 : vector<16x16x4xbf16> to vector<256x4xbf16>
    %c3 = arith.constant 3 : index
    %c0_9 = arith.constant 0 : index
    %c0_10 = arith.constant 0 : index
    %12 = vector.load %arg2[%c3, %c0_9, %c0_10] : memref<9x8x4xbf16, #tpu.memory_space<vmem>>, vector<1x8x4xbf16>
    %13 = vector.shape_cast %12 : vector<1x8x4xbf16> to vector<8x4xbf16>
    %cst_11 = arith.constant dense<0.000000e+00> : vector<8x256xf32>
    %14 = tpu.matmul %13, %11, %cst_11 {dimension_numbers = #tpu.dot_dimension_numbers<[1], [1], [0], [0], [0, 0, 1, 0], [], []>} : vector<8x4xbf16>, vector<256x4xbf16>, vector<8x256xf32> -> vector<8x256xf32>
    %15 = arith.addf %9, %14 : vector<8x256xf32>
    %16 = vector.extract_strided_slice %2 {offsets = [2, 0, 0], sizes = [16, 16, 4], strides = [1, 1, 1]} : vector<18x24x4xbf16> to vector<16x16x4xbf16>
    %17 = vector.shape_cast %16 : vector<16x16x4xbf16> to vector<256x4xbf16>
    %c6 = arith.constant 6 : index
    %c0_12 = arith.constant 0 : index
    %c0_13 = arith.constant 0 : index
    %18 = vector.load %arg2[%c6, %c0_12, %c0_13] : memref<9x8x4xbf16, #tpu.memory_space<vmem>>, vector<1x8x4xbf16>
    %19 = vector.shape_cast %18 : vector<1x8x4xbf16> to vector<8x4xbf16>
    %cst_14 = arith.constant dense<0.000000e+00> : vector<8x256xf32>
    %20 = tpu.matmul %19, %17, %cst_14 {dimension_numbers = #tpu.dot_dimension_numbers<[1], [1], [0], [0], [0, 0, 1, 0], [], []>} : vector<8x4xbf16>, vector<256x4xbf16>, vector<8x256xf32> -> vector<8x256xf32>
    %21 = arith.addf %15, %20 : vector<8x256xf32>
    %22 = vector.extract_strided_slice %2 {offsets = [0, 1, 0], sizes = [16, 16, 4], strides = [1, 1, 1]} : vector<18x24x4xbf16> to vector<16x16x4xbf16>
    %23 = vector.shape_cast %22 : vector<16x16x4xbf16> to vector<256x4xbf16>
    %c1 = arith.constant 1 : index
    %c0_15 = arith.constant 0 : index
    %c0_16 = arith.constant 0 : index
    %24 = vector.load %arg2[%c1, %c0_15, %c0_16] : memref<9x8x4xbf16, #tpu.memory_space<vmem>>, vector<1x8x4xbf16>
    %25 = vector.shape_cast %24 : vector<1x8x4xbf16> to vector<8x4xbf16>
    %cst_17 = arith.constant dense<0.000000e+00> : vector<8x256xf32>
    %26 = tpu.matmul %25, %23, %cst_17 {dimension_numbers = #tpu.dot_dimension_numbers<[1], [1], [0], [0], [0, 0, 1, 0], [], []>} : vector<8x4xbf16>, vector<256x4xbf16>, vector<8x256xf32> -> vector<8x256xf32>
    %27 = arith.addf %21, %26 : vector<8x256xf32>
    %28 = vector.extract_strided_slice %2 {offsets = [1, 1, 0], sizes = [16, 16, 4], strides = [1, 1, 1]} : vector<18x24x4xbf16> to vector<16x16x4xbf16>
    %29 = vector.shape_cast %28 : vector<16x16x4xbf16> to vector<256x4xbf16>
    %c4 = arith.constant 4 : index
    %c0_18 = arith.constant 0 : index
    %c0_19 = arith.constant 0 : index
    %30 = vector.load %arg2[%c4, %c0_18, %c0_19] : memref<9x8x4xbf16, #tpu.memory_space<vmem>>, vector<1x8x4xbf16>
    %31 = vector.shape_cast %30 : vector<1x8x4xbf16> to vector<8x4xbf16>
    %cst_20 = arith.constant dense<0.000000e+00> : vector<8x256xf32>
    %32 = tpu.matmul %31, %29, %cst_20 {dimension_numbers = #tpu.dot_dimension_numbers<[1], [1], [0], [0], [0, 0, 1, 0], [], []>} : vector<8x4xbf16>, vector<256x4xbf16>, vector<8x256xf32> -> vector<8x256xf32>
    %33 = arith.addf %27, %32 : vector<8x256xf32>
    %34 = vector.extract_strided_slice %2 {offsets = [2, 1, 0], sizes = [16, 16, 4], strides = [1, 1, 1]} : vector<18x24x4xbf16> to vector<16x16x4xbf16>
    %35 = vector.shape_cast %34 : vector<16x16x4xbf16> to vector<256x4xbf16>
    %c7 = arith.constant 7 : index
    %c0_21 = arith.constant 0 : index
    %c0_22 = arith.constant 0 : index
    %36 = vector.load %arg2[%c7, %c0_21, %c0_22] : memref<9x8x4xbf16, #tpu.memory_space<vmem>>, vector<1x8x4xbf16>
    %37 = vector.shape_cast %36 : vector<1x8x4xbf16> to vector<8x4xbf16>
    %cst_23 = arith.constant dense<0.000000e+00> : vector<8x256xf32>
    %38 = tpu.matmul %37, %35, %cst_23 {dimension_numbers = #tpu.dot_dimension_numbers<[1], [1], [0], [0], [0, 0, 1, 0], [], []>} : vector<8x4xbf16>, vector<256x4xbf16>, vector<8x256xf32> -> vector<8x256xf32>
    %39 = arith.addf %33, %38 : vector<8x256xf32>
    %40 = vector.extract_strided_slice %2 {offsets = [0, 2, 0], sizes = [16, 16, 4], strides = [1, 1, 1]} : vector<18x24x4xbf16> to vector<16x16x4xbf16>
    %41 = vector.shape_cast %40 : vector<16x16x4xbf16> to vector<256x4xbf16>
    %c2 = arith.constant 2 : index
    %c0_24 = arith.constant 0 : index
    %c0_25 = arith.constant 0 : index
    %42 = vector.load %arg2[%c2, %c0_24, %c0_25] : memref<9x8x4xbf16, #tpu.memory_space<vmem>>, vector<1x8x4xbf16>
    %43 = vector.shape_cast %42 : vector<1x8x4xbf16> to vector<8x4xbf16>
    %cst_26 = arith.constant dense<0.000000e+00> : vector<8x256xf32>
    %44 = tpu.matmul %43, %41, %cst_26 {dimension_numbers = #tpu.dot_dimension_numbers<[1], [1], [0], [0], [0, 0, 1, 0], [], []>} : vector<8x4xbf16>, vector<256x4xbf16>, vector<8x256xf32> -> vector<8x256xf32>
    %45 = arith.addf %39, %44 : vector<8x256xf32>
    %46 = vector.extract_strided_slice %2 {offsets = [1, 2, 0], sizes = [16, 16, 4], strides = [1, 1, 1]} : vector<18x24x4xbf16> to vector<16x16x4xbf16>
    %47 = vector.shape_cast %46 : vector<16x16x4xbf16> to vector<256x4xbf16>
    %c5 = arith.constant 5 : index
    %c0_27 = arith.constant 0 : index
    %c0_28 = arith.constant 0 : index
    %48 = vector.load %arg2[%c5, %c0_27, %c0_28] : memref<9x8x4xbf16, #tpu.memory_space<vmem>>, vector<1x8x4xbf16>
    %49 = vector.shape_cast %48 : vector<1x8x4xbf16> to vector<8x4xbf16>
    %cst_29 = arith.constant dense<0.000000e+00> : vector<8x256xf32>
    %50 = tpu.matmul %49, %47, %cst_29 {dimension_numbers = #tpu.dot_dimension_numbers<[1], [1], [0], [0], [0, 0, 1, 0], [], []>} : vector<8x4xbf16>, vector<256x4xbf16>, vector<8x256xf32> -> vector<8x256xf32>
    %51 = arith.addf %45, %50 : vector<8x256xf32>
    %52 = vector.extract_strided_slice %2 {offsets = [2, 2, 0], sizes = [16, 16, 4], strides = [1, 1, 1]} : vector<18x24x4xbf16> to vector<16x16x4xbf16>
    %53 = vector.shape_cast %52 : vector<16x16x4xbf16> to vector<256x4xbf16>
    %c8 = arith.constant 8 : index
    %c0_30 = arith.constant 0 : index
    %c0_31 = arith.constant 0 : index
    %54 = vector.load %arg2[%c8, %c0_30, %c0_31] : memref<9x8x4xbf16, #tpu.memory_space<vmem>>, vector<1x8x4xbf16>
    %55 = vector.shape_cast %54 : vector<1x8x4xbf16> to vector<8x4xbf16>
    %cst_32 = arith.constant dense<0.000000e+00> : vector<8x256xf32>
    %56 = tpu.matmul %55, %53, %cst_32 {dimension_numbers = #tpu.dot_dimension_numbers<[1], [1], [0], [0], [0, 0, 1, 0], [], []>} : vector<8x4xbf16>, vector<256x4xbf16>, vector<8x256xf32> -> vector<8x256xf32>
    %57 = arith.addf %51, %56 : vector<8x256xf32>
    %58 = vector.broadcast %0 : vector<8x1xf32> to vector<8x256xf32>
    %59 = arith.addf %57, %58 : vector<8x256xf32>
    %cst_33 = arith.constant 0.000000e+00 : f32
    %60 = vector.broadcast %cst_33 : f32 to vector<8x256xf32>
    %61 = arith.maximumf %59, %60 : vector<8x256xf32>
    %62 = arith.truncf %61 : vector<8x256xf32> to vector<8x256xbf16>
    %c0_34 = arith.constant 0 : index
    %c0_35 = arith.constant 0 : index
    %c0_36 = arith.constant 0 : index
    %63 = vector.load %arg4[%c0_34, %c0_35, %c0_36] : memref<1x8x256xbf16, #tpu.memory_space<vmem>>, vector<1x8x256xbf16>
    %64 = vector.shape_cast %63 : vector<1x8x256xbf16> to vector<8x256xbf16>
    %65 = vector.shape_cast %62 : vector<8x256xbf16> to vector<1x8x256xbf16>
    tpu.vector_store %arg4[%c0_34, %c0_35, %c0_36], %65 {strides = array<i32>} : memref<1x8x256xbf16, #tpu.memory_space<vmem>>, vector<1x8x256xbf16>,
    return
  }
  func.func @transform_0(%arg0: i32) -> (i32, i32, i32, i32) {
    %c0_i32 = arith.constant 0 : i32
    %c0_i32_0 = arith.constant 0 : i32
    %c0_i32_1 = arith.constant 0 : i32
    %c0_i32_2 = arith.constant 0 : i32
    return %arg0, %c0_i32, %c0_i32_0, %c0_i32_1 : i32, i32, i32, i32
  }
  func.func @transform_1(%arg0: i32) -> (i32, i32, i32) {
    %c0_i32 = arith.constant 0 : i32
    %c0_i32_0 = arith.constant 0 : i32
    %c0_i32_1 = arith.constant 0 : i32
    %c0_i32_2 = arith.constant 0 : i32
    return %c0_i32, %c0_i32_0, %c0_i32_1 : i32, i32, i32
  }
  func.func @transform_2(%arg0: i32) -> (i32, i32) {
    %c0_i32 = arith.constant 0 : i32
    %c0_i32_0 = arith.constant 0 : i32
    %c0_i32_1 = arith.constant 0 : i32
    return %c0_i32, %c0_i32_0 : i32, i32
  }
  func.func @transform_3(%arg0: i32) -> (i32, i32, i32) {
    %c0_i32 = arith.constant 0 : i32
    %c0_i32_0 = arith.constant 0 : i32
    %c0_i32_1 = arith.constant 0 : i32
    return %arg0, %c0_i32, %c0_i32_0 : i32, i32, i32
  }
}

</mosaic_0001>

<llo_original>
// kernel: tpu_custom_call.1
$region0: #{tpu_custom_call.1}
  #allocation0 [shape = 'u32[]', space=smem, size = 0x4, offset = 0x4, fixed_abs, tag = 'smem constant byte address 0x4 - core index']
  #allocation1 [shape = 'u32[144,128]{1,0:T(1,128)}', space=vmem, size = 0x12000, scoped, tag = 'internal scratch']
  %s0 = inlined_call_operand.vmem [shape: bf16[2,18,24,4], index: 0, kind: input, shape index: {}]
  %s1 = inlined_call_operand.vmem [shape: bf16[9,8,4], index: 1, kind: input, shape index: {}]
  %s2 = inlined_call_operand.vmem [shape: f32[8,1], index: 2, kind: input, shape index: {}]
  %s3 = inlined_call_operand.hbm [shape: bf16[2,8,256], index: 3, kind: output, shape index: {}]
  %s4 = sld [smem:[#allocation0]]
  $region45: #{tpu_custom_call.1} parent=0
    _
  %s6 = ssub.s32 1, %s4
  %s7 = scalar_select 0, %s6, %s4
  $region1: #{tpu_custom_call.1} parent=0
    #allocation2 [shape = 'u8[8192]{0}', space=vmem, size = 0x2000, scoped, tag = 'output window, operand 0']
    #allocation3 [shape = 's32[2]{0}', space=sflag, size = 0x8, scoped, tag = 'scoped memory for tpu_custom_call.1']
    %8 = vsyncpa [#allocation3], 0
    %s9 = scalar_lea.sflag [#allocation3], 1
    %10 = vsyncpa %s9, 0
    loop: start=0, step=1, limit=4
    $region2: #{tpu_custom_call.1} parent=1 // loop_pre_header
      _
    $region3: #{tpu_custom_call.1} parent=1 // loop_header
      %s12 = sphi 0, %s16
      %p13 = scmp.ge.s32.totalorder %s12, 4
      %s22 = sphi 0, %s24
      %s25 = sphi 0, %s22
      %s26 = sphi 0, %s25
      %s42 = sphi 0, %s26
      %s46 = sphi 0, %s46
      %s48 = sphi 0, %s46
      %s49 = sphi 0, %s48
      %s63 = sphi 0, %s49
      %s67 = sphi 0, %s67
      %s69 = sphi 0, %s67
      %s70 = sphi 0, %s69
      %s84 = sphi 0, %s70
      %s90 = sphi 0, %s92
      %s93 = sphi 0, %s90
      %s94 = sphi 0, %s93
      %s110 = sphi 0, %s94
    $region4: #{tpu_custom_call.1} parent=1 // loop_header_branch
      %15 = sbr.rel (%p13) target = $region8
    $region5: #{tpu_custom_call.1} parent=1 // loop_body
      %s17 = ssub.s32 %s12, 1
      %s18 = ssub.s32 %s12, 2
      %s19 = sadd.s32 %s12, 1
      %s20 = ssub.s32 %s12, %s19
      %p21 = scmp.eq.s32.totalorder %s20, 0
      %s23 = sadd.s32 %s22, 1
      %s24 = scalar_select %p21, %s22, %s23
      %p27 = pneg %p21
      %p28 = scmp.eq.s32.totalorder %s12, 1
      %p29 = por %p27, %p28
      %p30 = scmp.ne.s32.totalorder %s22, %s25
      %p31 = scmp.eq.s32.totalorder %s12, 0
      %p32 = por %p30, %p31
      %p33 = scmp.ne.s32.totalorder %s22, %s25
      %p34 = scmp.eq.s32.totalorder %s17, 1
      %p35 = por %p33, %p34
      %p36 = scmp.ne.s32.totalorder %s25, %s26
      %p37 = scmp.eq.s32.totalorder %s17, 0
      %p38 = por %p36, %p37
      %p39 = scmp.ne.s32.totalorder %s25, %s26
      %p40 = scmp.eq.s32.totalorder %s18, 1
      %p41 = por %p39, %p40
      %p43 = scmp.ne.s32.totalorder %s26, %s42
      %p44 = scmp.eq.s32.totalorder %s18, 0
      %p45 = por %p43, %p44
      %s47 = sadd.s32 %s46, 1
      %p50 = scmp.eq.s32.totalorder %s12, 1
      %p51 = scmp.ne.s32.totalorder %s46, %s48
      %p52 = scmp.eq.s32.totalorder %s12, 0
      %p53 = por %p51, %p52
      %p54 = scmp.ne.s32.totalorder %s46, %s48
      %p55 = scmp.eq.s32.totalorder %s17, 1
      %p56 = por %p54, %p55
      %p57 = scmp.ne.s32.totalorder %s48, %s49
      %p58 = scmp.eq.s32.totalorder %s17, 0
      %p59 = por %p57, %p58
      %p60 = scmp.ne.s32.totalorder %s48, %s49
      %p61 = scmp.eq.s32.totalorder %s18, 1
      %p62 = por %p60, %p61
      %p64 = scmp.ne.s32.totalorder %s49, %s63
      %p65 = scmp.eq.s32.totalorder %s18, 0
      %p66 = por %p64, %p65
      %s68 = sadd.s32 %s67, 1
      %p71 = scmp.eq.s32.totalorder %s12, 1
      %p72 = scmp.ne.s32.totalorder %s67, %s69
      %p73 = scmp.eq.s32.totalorder %s12, 0
      %p74 = por %p72, %p73
      %p75 = scmp.ne.s32.totalorder %s67, %s69
      %p76 = scmp.eq.s32.totalorder %s17, 1
      %p77 = por %p75, %p76
      %p78 = scmp.ne.s32.totalorder %s69, %s70
      %p79 = scmp.eq.s32.totalorder %s17, 0
      %p80 = por %p78, %p79
      %p81 = scmp.ne.s32.totalorder %s69, %s70
      %p82 = scmp.eq.s32.totalorder %s18, 1
      %p83 = por %p81, %p82
      %p85 = scmp.ne.s32.totalorder %s70, %s84
      %p86 = scmp.eq.s32.totalorder %s18, 0
      %p87 = por %p85, %p86
      %s88 = ssub.s32 %s12, %s19
      %p89 = scmp.eq.s32.totalorder %s88, 0
      %s91 = sadd.s32 %s90, 1
      %s92 = scalar_select %p89, %s90, %s91
      %p95 = pneg %p89
      %p96 = scmp.eq.s32.totalorder %s12, 1
      %p97 = por %p95, %p96
      %p98 = scmp.ne.s32.totalorder %s90, %s93
      %p99 = scmp.eq.s32.totalorder %s12, 0
      %p100 = por %p98, %p99
      %p101 = scmp.ne.s32.totalorder %s90, %s93
      %p102 = scmp.eq.s32.totalorder %s17, 1
      %p103 = por %p101, %p102
      %p104 = scmp.ne.s32.totalorder %s93, %s94
      %p105 = scmp.eq.s32.totalorder %s17, 0
      %p106 = por %p104, %p105
      %p107 = scmp.ne.s32.totalorder %s93, %s94
      %p108 = scmp.eq.s32.totalorder %s18, 1
      %p109 = por %p107, %p108
      %p111 = scmp.ne.s32.totalorder %s94, %s110
      %p112 = scmp.eq.s32.totalorder %s18, 0
      %p113 = por %p111, %p112
      %p114 = scmp.le.s32.totalorder 1, %s12
      %p115 = scmp.lt.s32.totalorder %s12, 3
      %p116 = pnand %p114, %p115
      %p117 = pneg %p116
      // Predicated region
      $region9: #{tpu_custom_call.1} parent=5 // pred_check
        _
      $region10: #{tpu_custom_call.1} parent=5 // pred_check_branch
        %119 = sbr.rel (%p116) target = $region12
      $region11: #{tpu_custom_call.1} parent=5 // pred_region
        %s120 = ssub.s32 %s12, 1
        // Predicated region
        $region13: #{tpu_custom_call.1} parent=11 // pred_check
          %p121 = pneg %p59
        $region14: #{tpu_custom_call.1} parent=11 // pred_check_branch
          %123 = sbr.rel (%p121) target = $region16
        $region15: #{tpu_custom_call.1} parent=11 // pred_region
          _
        $region16: #{tpu_custom_call.1} parent=11 // pred_fallthru
          _
        // Predicated region
        $region17: #{tpu_custom_call.1} parent=11 // pred_check
          %p124 = pneg %p80
        $region18: #{tpu_custom_call.1} parent=11 // pred_check_branch
          %126 = sbr.rel (%p124) target = $region20
        $region19: #{tpu_custom_call.1} parent=11 // pred_region
          _
        $region20: #{tpu_custom_call.1} parent=11 // pred_fallthru
          _
      $region12: #{tpu_custom_call.1} parent=5 // pred_fallthru
        _
      %p127 = scmp.lt.s32.totalorder %s12, 2
      // Predicated region
      $region21: #{tpu_custom_call.1} parent=5 // pred_check
        %p128 = pneg %p127
      $region22: #{tpu_custom_call.1} parent=5 // pred_check_branch
        %130 = sbr.rel (%p128) target = $region24
      $region23: #{tpu_custom_call.1} parent=5 // pred_region
        // Predicated region
        $region25: #{tpu_custom_call.1} parent=23 // pred_check
          %p131 = pneg %p32
        $region26: #{tpu_custom_call.1} parent=23 // pred_check_branch
          %133 = sbr.rel (%p131) target = $region28
        $region27: #{tpu_custom_call.1} parent=23 // pred_region
          %p134 = scmp.lt.s32.totalorder %s12, 1
          %s135 = scalar_select %p134, %s12, 1
          %s136 = smul.addr %s135, 54
          %s137 = smul.addr %s136, 4
          %s138 = scalar_lea.vmem %s0, %s137
        $region28: #{tpu_custom_call.1} parent=23 // pred_fallthru
          _
      $region24: #{tpu_custom_call.1} parent=5 // pred_fallthru
        _
      %p139 = scmp.le.s32.totalorder 1, %s12
      %p140 = scmp.lt.s32.totalorder %s12, 3
      %p141 = pnand %p139, %p140
      %p142 = pneg %p141
      // Predicated region
      $region29: #{tpu_custom_call.1} parent=5 // pred_check
        _
      $region30: #{tpu_custom_call.1} parent=5 // pred_check_branch
        %144 = sbr.rel (%p141) target = $region32
      $region31: #{tpu_custom_call.1} parent=5 // pred_region
        %s145 = ssub.s32 %s12, 1
        %p146 = scmp.lt.s32.totalorder %s17, 1
        %s147 = scalar_select %p146, %s17, 1
        %s148 = smul.addr %s147, 54
        %s149 = smul.addr %s148, 4
        %s150 = scalar_lea.vmem %s0, %s149
        %p151 = pneg %p38
        %p152 = pneg %p35
        %p153 = pneg %p59
        %p154 = pneg %p56
        %p155 = pneg %p80
        %p156 = pneg %p77
        %p157 = pneg %p106
        %p158 = pneg %p103
        %s159 = sand.u32 %s93, 1
        %s160 = scalar_lea.sflag [#allocation3], %s159
        %s161 = sand.u32 %s93, 1
        %s162 = smul.addr %s161, 8
        %s163 = scalar_lea.vmem [#allocation2], %s162
        %p164 = scmp.lt.s32.totalorder %s17, 1
        %s165 = scalar_select %p164, %s17, 1
        %s166 = smul.addr %s165, 54
        %s167 = smul.addr %s166, 4
        %s168 = scalar_lea.vmem %s0, %s167
        %v170 = vld [vmem:[%s2] sm:$0xff]
        %v171 = vld [vmem:[%s168] sm:$0xf]
        %v172 = vld [vmem:[%s168 + $0x4] sm:$0xf]
        %v173 = vld [vmem:[%s168 + $0x8] sm:$0xf]
        %v174 = vld [vmem:[%s168 + $0xc] sm:$0xf]
        %v175 = vld [vmem:[%s168 + $0x10] sm:$0xf]
        %v176 = vld [vmem:[%s168 + $0x14] sm:$0xf]
        %v177 = vld [vmem:[%s168 + $0x18] sm:$0xf]
        %v178 = vld [vmem:[%s168 + $0x1c] sm:$0xf]
        %v179 = vld [vmem:[%s168 + $0x20] sm:$0xf]
        %v180 = vld [vmem:[%s168 + $0x24] sm:$0xf]
        %v181 = vld [vmem:[%s168 + $0x28] sm:$0xf]
        %v182 = vld [vmem:[%s168 + $0x2c] sm:$0xf]
        %v183 = vld [vmem:[%s168 + $0x30] sm:$0xf]
        %v184 = vld [vmem:[%s168 + $0x34] sm:$0xf]
        %v185 = vld [vmem:[%s168 + $0x38] sm:$0xf]
        %v186 = vld [vmem:[%s168 + $0x3c] sm:$0xf]
        %v187 = vld [vmem:[%s168 + $0x40] sm:$0xf]
        %v188 = vld [vmem:[%s168 + $0x44] sm:$0xf]
        %v189 = vld [vmem:[%s168 + $0x48] sm:$0xf]
        %v190 = vld [vmem:[%s168 + $0x4c] sm:$0xf]
        %v191 = vld [vmem:[%s168 + $0x50] sm:$0xf]
        %v192 = vld [vmem:[%s168 + $0x54] sm:$0xf]
        %v193 = vld [vmem:[%s168 + $0x58] sm:$0xf]
        %v194 = vld [vmem:[%s168 + $0x5c] sm:$0xf]
        %v195 = vld [vmem:[%s168 + $0x60] sm:$0xf]
        %v196 = vld [vmem:[%s168 + $0x64] sm:$0xf]
        %v197 = vld [vmem:[%s168 + $0x68] sm:$0xf]
        %v198 = vld [vmem:[%s168 + $0x6c] sm:$0xf]
        %v199 = vld [vmem:[%s168 + $0x70] sm:$0xf]
        %v200 = vld [vmem:[%s168 + $0x74] sm:$0xf]
        %v201 = vld [vmem:[%s168 + $0x78] sm:$0xf]
        %v202 = vld [vmem:[%s168 + $0x7c] sm:$0xf]
        %v203 = vld [vmem:[%s168 + $0x80] sm:$0xf]
        %v204 = vld [vmem:[%s168 + $0x84] sm:$0xf]
        %v205 = vld [vmem:[%s168 + $0x88] sm:$0xf]
        %v206 = vld [vmem:[%s168 + $0x8c] sm:$0xf]
        %v207 = vld [vmem:[%s168 + $0x90] sm:$0xf]
        %v208 = vld [vmem:[%s168 + $0x94] sm:$0xf]
        %v209 = vld [vmem:[%s168 + $0x98] sm:$0xf]
        %v210 = vld [vmem:[%s168 + $0x9c] sm:$0xf]
        %v211 = vld [vmem:[%s168 + $0xa0] sm:$0xf]
        %v212 = vld [vmem:[%s168 + $0xa4] sm:$0xf]
        %v213 = vld [vmem:[%s168 + $0xa8] sm:$0xf]
        %v214 = vld [vmem:[%s168 + $0xac] sm:$0xf]
        %v215 = vld [vmem:[%s168 + $0xb0] sm:$0xf]
        %v216 = vld [vmem:[%s168 + $0xb4] sm:$0xf]
        %v217 = vld [vmem:[%s168 + $0xb8] sm:$0xf]
        %v218 = vld [vmem:[%s168 + $0xbc] sm:$0xf]
        %v219 = vld [vmem:[%s168 + $0xc0] sm:$0xf]
        %v220 = vld [vmem:[%s168 + $0xc4] sm:$0xf]
        %v221 = vld [vmem:[%s168 + $0xc8] sm:$0xf]
        %v222 = vld [vmem:[%s168 + $0xcc] sm:$0xf]
        %v223 = vld [vmem:[%s168 + $0xd0] sm:$0xf]
        %v224 = vld [vmem:[%s168 + $0xd4] sm:$0xf]
        %v225 = vld [vmem:[%s1] sm:$0xf]
        %s226 = scalar_lea.vmem %s1, 12
        %v227 = vld [vmem:[%s226] sm:$0xf]
        %v260 = vunpack.c.l.b16 %v174
        %v261 = vunpack.c.l.b16 %v175
        %v262 = vunpack.c.l.b16 %v177
        %v263 = vunpack.c.l.b16 %v178
        %v264 = vunpack.c.l.b16 %v180
        %v265 = vunpack.c.l.b16 %v181
        %v266 = vunpack.c.l.b16 %v183
        %v267 = vunpack.c.l.b16 %v184
        %v268 = vunpack.c.l.b16 %v186
        %v269 = vunpack.c.l.b16 %v187
        %v270 = vunpack.c.l.b16 %v189
        %v271 = vunpack.c.l.b16 %v190
        %v272 = vunpack.c.l.b16 %v192
        %v273 = vunpack.c.l.b16 %v193
        %v274 = vunpack.c.l.b16 %v195
        %v275 = vunpack.c.l.b16 %v196
        %v276 = vunpack.c.l.b16 %v198
        %v277 = vunpack.c.l.b16 %v199
        %v278 = vunpack.c.l.b16 %v201
        %v279 = vunpack.c.l.b16 %v202
        %v280 = vunpack.c.l.b16 %v204
        %v281 = vunpack.c.l.b16 %v205
        %v282 = vunpack.c.l.b16 %v207
        %v283 = vunpack.c.l.b16 %v208
        %v284 = vunpack.c.l.b16 %v210
        %v285 = vunpack.c.l.b16 %v211
        %v286 = vunpack.c.l.b16 %v213
        %v287 = vunpack.c.l.b16 %v214
        %v288 = vunpack.c.l.b16 %v216
        %v289 = vunpack.c.l.b16 %v217
        %v290 = vunpack.c.l.b16 %v219
        %v291 = vunpack.c.l.b16 %v220
        %v292 = vpack.c.b16 %v261, %v260
        %v293 = vpack.c.b16 %v263, %v262
        %v294 = vpack.c.b16 %v265, %v264
        %v295 = vpack.c.b16 %v267, %v266
        %v296 = vpack.c.b16 %v269, %v268
        %v297 = vpack.c.b16 %v271, %v270
        %v298 = vpack.c.b16 %v273, %v272
        %v299 = vpack.c.b16 %v275, %v274
        %v300 = vpack.c.b16 %v277, %v276
        %v301 = vpack.c.b16 %v279, %v278
        %v302 = vpack.c.b16 %v281, %v280
        %v303 = vpack.c.b16 %v283, %v282
        %v304 = vpack.c.b16 %v285, %v284
        %v305 = vpack.c.b16 %v287, %v286
        %v306 = vpack.c.b16 %v289, %v288
        %v307 = vpack.c.b16 %v291, %v290
        %vm308 = vcmask 31744
        %v310 = vsel %vm308, %v227, 0
        %v313 = vsel %vm308, %v292, 0
        %v316 = vsel %vm308, %v293, 0
        %v319 = vsel %vm308, %v294, 0
        %v322 = vsel %vm308, %v295, 0
        %v325 = vsel %vm308, %v296, 0
        %v328 = vsel %vm308, %v297, 0
        %v331 = vsel %vm308, %v298, 0
        %v334 = vsel %vm308, %v299, 0
        %v337 = vsel %vm308, %v300, 0
        %v340 = vsel %vm308, %v301, 0
        %v343 = vsel %vm308, %v302, 0
        %v346 = vsel %vm308, %v303, 0
        %v349 = vsel %vm308, %v304, 0
        %v352 = vsel %vm308, %v305, 0
        %v355 = vsel %vm308, %v306, 0
        %v358 = vsel %vm308, %v307, 0
        %360 = vmatprep.subr.bf16.mxu0 0
        %361 = vmatpush1.bf16.xpose.msra.mxu0 %v313
        %362 = vmatprep.subr.bf16.mxu0 0
        %363 = vmatpush1.bf16.xpose.msra.mxu0 %v316
        %364 = vmatprep.subr.bf16.mxu0 0
        %365 = vmatpush1.bf16.xpose.msra.mxu0 %v319
        %366 = vmatprep.subr.bf16.mxu0 0
        %367 = vmatpush1.bf16.xpose.msra.mxu0 %v322
        %368 = vmatprep.subr.bf16.mxu0 0
        %369 = vmatpush1.bf16.xpose.msra.mxu0 %v325
        %370 = vmatprep.subr.bf16.mxu0 0
        %371 = vmatpush1.bf16.xpose.msra.mxu0 %v328
        %372 = vmatprep.subr.bf16.mxu0 0
        %373 = vmatpush1.bf16.xpose.msra.mxu0 %v331
        %374 = vmatprep.subr.bf16.mxu0 0
        %375 = vmatpush1.bf16.xpose.msra.mxu0 %v334
        %376 = vmatprep.subr.bf16.mxu0 0
        %377 = vmatpush1.bf16.xpose.msra.mxu0 %v337
        %378 = vmatprep.subr.bf16.mxu0 0
        %379 = vmatpush1.bf16.xpose.msra.mxu0 %v340
        %380 = vmatprep.subr.bf16.mxu0 0
        %381 = vmatpush1.bf16.xpose.msra.mxu0 %v343
        %382 = vmatprep.subr.bf16.mxu0 0
        %383 = vmatpush1.bf16.xpose.msra.mxu0 %v346
        %384 = vmatprep.subr.bf16.mxu0 0
        %385 = vmatpush1.bf16.xpose.msra.mxu0 %v349
        %386 = vmatprep.subr.bf16.mxu0 0
        %387 = vmatpush1.bf16.xpose.msra.mxu0 %v352
        %388 = vmatprep.subr.bf16.mxu0 0
        %389 = vmatpush1.bf16.xpose.msra.mxu0 %v355
        %390 = vmatprep.subr.bf16.mxu0 0
        %391 = vmatpush1.bf16.xpose.msra.mxu0 %v358
        %392 = vmatprep.mubr.bf16.mxu0 0
        %393 = vmatmul.mubr.bf16.gmra.mrb[0].mxu0 %v310
        %v394 = vpop.f32.mrb[0].mxu0
        %v395 = vadd.f32 0.0, %v394
        %v396 = vpop.f32.mrb[0].mxu0
        %v397 = vadd.f32 0.0, %v396
        %v398 = vpop.f32.mrb[0].mxu0
        %v399 = vpop.f32.mrb[0].mxu0
        %400 = vdwg.mxu0
        %v403 = vunpack.c.l.b16 %v171
        %v404 = vunpack.c.l.b16 %v172
        %v405 = vpack.c.b16 %v404, %v403
        %v407 = vsel %vm308, %v225, 0
        %v410 = vsel %vm308, %v405, 0
        %412 = vmatprep.subr.bf16.mxu0 0
        %413 = vmatpush1.bf16.xpose.msra.mxu0 %v410
        %414 = vmatprep.subr.bf16.mxu0 0
        %415 = vmatpush1.bf16.xpose.msra.mxu0 %v313
        %416 = vmatprep.subr.bf16.mxu0 0
        %417 = vmatpush1.bf16.xpose.msra.mxu0 %v316
        %418 = vmatprep.subr.bf16.mxu0 0
        %419 = vmatpush1.bf16.xpose.msra.mxu0 %v319
        %420 = vmatprep.subr.bf16.mxu0 0
        %421 = vmatpush1.bf16.xpose.msra.mxu0 %v322
        %422 = vmatprep.subr.bf16.mxu0 0
        %423 = vmatpush1.bf16.xpose.msra.mxu0 %v325
        %424 = vmatprep.subr.bf16.mxu0 0
        %425 = vmatpush1.bf16.xpose.msra.mxu0 %v328
        %426 = vmatprep.subr.bf16.mxu0 0
        %427 = vmatpush1.bf16.xpose.msra.mxu0 %v331
        %428 = vmatprep.subr.bf16.mxu0 0
        %429 = vmatpush1.bf16.xpose.msra.mxu0 %v334
        %430 = vmatprep.subr.bf16.mxu0 0
        %431 = vmatpush1.bf16.xpose.msra.mxu0 %v337
        %432 = vmatprep.subr.bf16.mxu0 0
        %433 = vmatpush1.bf16.xpose.msra.mxu0 %v340
        %434 = vmatprep.subr.bf16.mxu0 0
        %435 = vmatpush1.bf16.xpose.msra.mxu0 %v343
        %436 = vmatprep.subr.bf16.mxu0 0
        %437 = vmatpush1.bf16.xpose.msra.mxu0 %v346
        %438 = vmatprep.subr.bf16.mxu0 0
        %439 = vmatpush1.bf16.xpose.msra.mxu0 %v349
        %440 = vmatprep.subr.bf16.mxu0 0
        %441 = vmatpush1.bf16.xpose.msra.mxu0 %v352
        %442 = vmatprep.subr.bf16.mxu0 0
        %443 = vmatpush1.bf16.xpose.msra.mxu0 %v355
        %444 = vmatprep.mubr.bf16.mxu0 0
        %445 = vmatmul.mubr.bf16.gmra.mrb[0].mxu0 %v407
        %v446 = vpop.f32.mrb[0].mxu0
        %v447 = vadd.f32 %v395, %v446
        %v448 = vpop.f32.mrb[0].mxu0
        %v449 = vadd.f32 %v397, %v448
        %v450 = vpop.f32.mrb[0].mxu0
        %v451 = vpop.f32.mrb[0].mxu0
        %452 = vdwg.mxu0
        %s453 = scalar_lea.vmem %s1, 24
        %v454 = vld [vmem:[%s453] sm:$0xf]
        %v457 = vunpack.c.l.b16 %v222
        %v458 = vunpack.c.l.b16 %v223
        %v459 = vpack.c.b16 %v458, %v457
        %v461 = vsel %vm308, %v454, 0
        %v464 = vsel %vm308, %v459, 0
        %466 = vmatprep.subr.bf16.mxu0 0
        %467 = vmatpush1.bf16.xpose.msra.mxu0 %v316
        %468 = vmatprep.subr.bf16.mxu0 0
        %469 = vmatpush1.bf16.xpose.msra.mxu0 %v319
        %470 = vmatprep.subr.bf16.mxu0 0
        %471 = vmatpush1.bf16.xpose.msra.mxu0 %v322
        %472 = vmatprep.subr.bf16.mxu0 0
        %473 = vmatpush1.bf16.xpose.msra.mxu0 %v325
        %474 = vmatprep.subr.bf16.mxu0 0
        %475 = vmatpush1.bf16.xpose.msra.mxu0 %v328
        %476 = vmatprep.subr.bf16.mxu0 0
        %477 = vmatpush1.bf16.xpose.msra.mxu0 %v331
        %478 = vmatprep.subr.bf16.mxu0 0
        %479 = vmatpush1.bf16.xpose.msra.mxu0 %v334
        %480 = vmatprep.subr.bf16.mxu0 0
        %481 = vmatpush1.bf16.xpose.msra.mxu0 %v337
        %482 = vmatprep.subr.bf16.mxu0 0
        %483 = vmatpush1.bf16.xpose.msra.mxu0 %v340
        %484 = vmatprep.subr.bf16.mxu0 0
        %485 = vmatpush1.bf16.xpose.msra.mxu0 %v343
        %486 = vmatprep.subr.bf16.mxu0 0
        %487 = vmatpush1.bf16.xpose.msra.mxu0 %v346
        %488 = vmatprep.subr.bf16.mxu0 0
        %489 = vmatpush1.bf16.xpose.msra.mxu0 %v349
        %490 = vmatprep.subr.bf16.mxu0 0
        %491 = vmatpush1.bf16.xpose.msra.mxu0 %v352
        %492 = vmatprep.subr.bf16.mxu0 0
        %493 = vmatpush1.bf16.xpose.msra.mxu0 %v355
        %494 = vmatprep.subr.bf16.mxu0 0
        %495 = vmatpush1.bf16.xpose.msra.mxu0 %v358
        %496 = vmatprep.subr.bf16.mxu0 0
        %497 = vmatpush1.bf16.xpose.msra.mxu0 %v464
        %498 = vmatprep.mubr.bf16.mxu0 0
        %499 = vmatmul.mubr.bf16.gmra.mrb[0].mxu0 %v461
        %v500 = vpop.f32.mrb[0].mxu0
        %v501 = vadd.f32 0.0, %v500
        %v502 = vpop.f32.mrb[0].mxu0
        %v503 = vadd.f32 0.0, %v502
        %v504 = vpop.f32.mrb[0].mxu0
        %v505 = vpop.f32.mrb[0].mxu0
        %506 = vdwg.mxu0
        %v507 = vadd.f32 %v447, %v501
        %v508 = vadd.f32 %v449, %v503
        %vm509 = vsmask.f32 3328
        %vm510 = vsmask.f32 7440
        %vm511 = vmor %vm509, %vm510
        %v513 = vshrl.u32 %v171, 16
        %v515 = vrot.slane %v513, 4
        %v516 = vshll.u32 %v171, 16
        %v518 = vrot.slane %v516, 5
        %v519 = vor.u32 %v515, %v518
        %v520 = vrot.slane %v519, 4
        %v522 = vshll.u32 %v172, 16
        %v524 = vrot.slane %v522, 5
        %v525 = vsel %vm511, %v520, %v524
        %v526 = vshrl.u32 %v172, 16
        %v528 = vrot.slane %v526, 4
        %v529 = vor.u32 %v528, %v524
        %v530 = vrot.slane %v529, 4
        %v532 = vshll.u32 %v173, 16
        %v534 = vrot.slane %v532, 5
        %v535 = vsel %vm511, %v530, %v534
        %v537 = vshrl.u32 %v174, 16
        %v539 = vrot.slane %v537, 4
        %v540 = vshll.u32 %v174, 16
        %v542 = vrot.slane %v540, 5
        %v543 = vor.u32 %v539, %v542
        %v544 = vrot.slane %v543, 4
        %v546 = vshll.u32 %v175, 16
        %v548 = vrot.slane %v546, 5
        %v549 = vsel %vm511, %v544, %v548
        %v550 = vshrl.u32 %v175, 16
        %v552 = vrot.slane %v550, 4
        %v553 = vor.u32 %v552, %v548
        %v554 = vrot.slane %v553, 4
        %v556 = vshll.u32 %v176, 16
        %v558 = vrot.slane %v556, 5
        %v559 = vsel %vm511, %v554, %v558
        %v561 = vshrl.u32 %v177, 16
        %v563 = vrot.slane %v561, 4
        %v564 = vshll.u32 %v177, 16
        %v566 = vrot.slane %v564, 5
        %v567 = vor.u32 %v563, %v566
        %v568 = vrot.slane %v567, 4
        %v570 = vshll.u32 %v178, 16
        %v572 = vrot.slane %v570, 5
        %v573 = vsel %vm511, %v568, %v572
        %v574 = vshrl.u32 %v178, 16
        %v576 = vrot.slane %v574, 4
        %v577 = vor.u32 %v576, %v572
        %v578 = vrot.slane %v577, 4
        %v580 = vshll.u32 %v179, 16
        %v582 = vrot.slane %v580, 5
        %v583 = vsel %vm511, %v578, %v582
        %v585 = vshrl.u32 %v180, 16
        %v587 = vrot.slane %v585, 4
        %v588 = vshll.u32 %v180, 16
        %v590 = vrot.slane %v588, 5
        %v591 = vor.u32 %v587, %v590
        %v592 = vrot.slane %v591, 4
        %v594 = vshll.u32 %v181, 16
        %v596 = vrot.slane %v594, 5
        %v597 = vsel %vm511, %v592, %v596
        %v598 = vshrl.u32 %v181, 16
        %v600 = vrot.slane %v598, 4
        %v601 = vor.u32 %v600, %v596
        %v602 = vrot.slane %v601, 4
        %v604 = vshll.u32 %v182, 16
        %v606 = vrot.slane %v604, 5
        %v607 = vsel %vm511, %v602, %v606
        %v609 = vshrl.u32 %v183, 16
        %v611 = vrot.slane %v609, 4
        %v612 = vshll.u32 %v183, 16
        %v614 = vrot.slane %v612, 5
        %v615 = vor.u32 %v611, %v614
        %v616 = vrot.slane %v615, 4
        %v618 = vshll.u32 %v184, 16
        %v620 = vrot.slane %v618, 5
        %v621 = vsel %vm511, %v616, %v620
        %v622 = vshrl.u32 %v184, 16
        %v624 = vrot.slane %v622, 4
        %v625 = vor.u32 %v624, %v620
        %v626 = vrot.slane %v625, 4
        %v628 = vshll.u32 %v185, 16
        %v630 = vrot.slane %v628, 5
        %v631 = vsel %vm511, %v626, %v630
        %v633 = vshrl.u32 %v186, 16
        %v635 = vrot.slane %v633, 4
        %v636 = vshll.u32 %v186, 16
        %v638 = vrot.slane %v636, 5
        %v639 = vor.u32 %v635, %v638
        %v640 = vrot.slane %v639, 4
        %v642 = vshll.u32 %v187, 16
        %v644 = vrot.slane %v642, 5
        %v645 = vsel %vm511, %v640, %v644
        %v646 = vshrl.u32 %v187, 16
        %v648 = vrot.slane %v646, 4
        %v649 = vor.u32 %v648, %v644
        %v650 = vrot.slane %v649, 4
        %v652 = vshll.u32 %v188, 16
        %v654 = vrot.slane %v652, 5
        %v655 = vsel %vm511, %v650, %v654
        %v657 = vshrl.u32 %v189, 16
        %v659 = vrot.slane %v657, 4
        %v660 = vshll.u32 %v189, 16
        %v662 = vrot.slane %v660, 5
        %v663 = vor.u32 %v659, %v662
        %v664 = vrot.slane %v663, 4
        %v666 = vshll.u32 %v190, 16
        %v668 = vrot.slane %v666, 5
        %v669 = vsel %vm511, %v664, %v668
        %v670 = vshrl.u32 %v190, 16
        %v672 = vrot.slane %v670, 4
        %v673 = vor.u32 %v672, %v668
        %v674 = vrot.slane %v673, 4
        %v676 = vshll.u32 %v191, 16
        %v678 = vrot.slane %v676, 5
        %v679 = vsel %vm511, %v674, %v678
        %v681 = vshrl.u32 %v192, 16
        %v683 = vrot.slane %v681, 4
        %v684 = vshll.u32 %v192, 16
        %v686 = vrot.slane %v684, 5
        %v687 = vor.u32 %v683, %v686
        %v688 = vrot.slane %v687, 4
        %v690 = vshll.u32 %v193, 16
        %v692 = vrot.slane %v690, 5
        %v693 = vsel %vm511, %v688, %v692
        %v694 = vshrl.u32 %v193, 16
        %v696 = vrot.slane %v694, 4
        %v697 = vor.u32 %v696, %v692
        %v698 = vrot.slane %v697, 4
        %v700 = vshll.u32 %v194, 16
        %v702 = vrot.slane %v700, 5
        %v703 = vsel %vm511, %v698, %v702
        %v705 = vshrl.u32 %v195, 16
        %v707 = vrot.slane %v705, 4
        %v708 = vshll.u32 %v195, 16
        %v710 = vrot.slane %v708, 5
        %v711 = vor.u32 %v707, %v710
        %v712 = vrot.slane %v711, 4
        %v714 = vshll.u32 %v196, 16
        %v716 = vrot.slane %v714, 5
        %v717 = vsel %vm511, %v712, %v716
        %v718 = vshrl.u32 %v196, 16
        %v720 = vrot.slane %v718, 4
        %v721 = vor.u32 %v720, %v716
        %v722 = vrot.slane %v721, 4
        %v724 = vshll.u32 %v197, 16
        %v726 = vrot.slane %v724, 5
        %v727 = vsel %vm511, %v722, %v726
        %v729 = vshrl.u32 %v198, 16
        %v731 = vrot.slane %v729, 4
        %v732 = vshll.u32 %v198, 16
        %v734 = vrot.slane %v732, 5
        %v735 = vor.u32 %v731, %v734
        %v736 = vrot.slane %v735, 4
        %v738 = vshll.u32 %v199, 16
        %v740 = vrot.slane %v738, 5
        %v741 = vsel %vm511, %v736, %v740
        %v742 = vshrl.u32 %v199, 16
        %v744 = vrot.slane %v742, 4
        %v745 = vor.u32 %v744, %v740
        %v746 = vrot.slane %v745, 4
        %v748 = vshll.u32 %v200, 16
        %v750 = vrot.slane %v748, 5
        %v751 = vsel %vm511, %v746, %v750
        %v753 = vshrl.u32 %v201, 16
        %v755 = vrot.slane %v753, 4
        %v756 = vshll.u32 %v201, 16
        %v758 = vrot.slane %v756, 5
        %v759 = vor.u32 %v755, %v758
        %v760 = vrot.slane %v759, 4
        %v762 = vshll.u32 %v202, 16
        %v764 = vrot.slane %v762, 5
        %v765 = vsel %vm511, %v760, %v764
        %v766 = vshrl.u32 %v202, 16
        %v768 = vrot.slane %v766, 4
        %v769 = vor.u32 %v768, %v764
        %v770 = vrot.slane %v769, 4
        %v772 = vshll.u32 %v203, 16
        %v774 = vrot.slane %v772, 5
        %v775 = vsel %vm511, %v770, %v774
        %v777 = vshrl.u32 %v204, 16
        %v779 = vrot.slane %v777, 4
        %v780 = vshll.u32 %v204, 16
        %v782 = vrot.slane %v780, 5
        %v783 = vor.u32 %v779, %v782
        %v784 = vrot.slane %v783, 4
        %v786 = vshll.u32 %v205, 16
        %v788 = vrot.slane %v786, 5
        %v789 = vsel %vm511, %v784, %v788
        %v790 = vshrl.u32 %v205, 16
        %v792 = vrot.slane %v790, 4
        %v793 = vor.u32 %v792, %v788
        %v794 = vrot.slane %v793, 4
        %v796 = vshll.u32 %v206, 16
        %v798 = vrot.slane %v796, 5
        %v799 = vsel %vm511, %v794, %v798
        %v801 = vshrl.u32 %v207, 16
        %v803 = vrot.slane %v801, 4
        %v804 = vshll.u32 %v207, 16
        %v806 = vrot.slane %v804, 5
        %v807 = vor.u32 %v803, %v806
        %v808 = vrot.slane %v807, 4
        %v810 = vshll.u32 %v208, 16
        %v812 = vrot.slane %v810, 5
        %v813 = vsel %vm511, %v808, %v812
        %v814 = vshrl.u32 %v208, 16
        %v816 = vrot.slane %v814, 4
        %v817 = vor.u32 %v816, %v812
        %v818 = vrot.slane %v817, 4
        %v820 = vshll.u32 %v209, 16
        %v822 = vrot.slane %v820, 5
        %v823 = vsel %vm511, %v818, %v822
        %v825 = vshrl.u32 %v210, 16
        %v827 = vrot.slane %v825, 4
        %v828 = vshll.u32 %v210, 16
        %v830 = vrot.slane %v828, 5
        %v831 = vor.u32 %v827, %v830
        %v832 = vrot.slane %v831, 4
        %v834 = vshll.u32 %v211, 16
        %v836 = vrot.slane %v834, 5
        %v837 = vsel %vm511, %v832, %v836
        %v838 = vshrl.u32 %v211, 16
        %v840 = vrot.slane %v838, 4
        %v841 = vor.u32 %v840, %v836
        %v842 = vrot.slane %v841, 4
        %v844 = vshll.u32 %v212, 16
        %v846 = vrot.slane %v844, 5
        %v847 = vsel %vm511, %v842, %v846
        %v849 = vshrl.u32 %v213, 16
        %v851 = vrot.slane %v849, 4
        %v852 = vshll.u32 %v213, 16
        %v854 = vrot.slane %v852, 5
        %v855 = vor.u32 %v851, %v854
        %v856 = vrot.slane %v855, 4
        %v858 = vshll.u32 %v214, 16
        %v860 = vrot.slane %v858, 5
        %v861 = vsel %vm511, %v856, %v860
        %v862 = vshrl.u32 %v214, 16
        %v864 = vrot.slane %v862, 4
        %v865 = vor.u32 %v864, %v860
        %v866 = vrot.slane %v865, 4
        %v868 = vshll.u32 %v215, 16
        %v870 = vrot.slane %v868, 5
        %v871 = vsel %vm511, %v866, %v870
        %v873 = vshrl.u32 %v216, 16
        %v875 = vrot.slane %v873, 4
        %v876 = vshll.u32 %v216, 16
        %v878 = vrot.slane %v876, 5
        %v879 = vor.u32 %v875, %v878
        %v880 = vrot.slane %v879, 4
        %v882 = vshll.u32 %v217, 16
        %v884 = vrot.slane %v882, 5
        %v885 = vsel %vm511, %v880, %v884
        %v886 = vshrl.u32 %v217, 16
        %v888 = vrot.slane %v886, 4
        %v889 = vor.u32 %v888, %v884
        %v890 = vrot.slane %v889, 4
        %v892 = vshll.u32 %v218, 16
        %v894 = vrot.slane %v892, 5
        %v895 = vsel %vm511, %v890, %v894
        %s896 = scalar_lea.vmem %s1, 4
        %v897 = vld [vmem:[%s896] sm:$0xf]
        %v898 = vunpack.c.l.b16 %v525
        %v899 = vunpack.c.l.b16 %v535
        %v900 = vunpack.c.l.b16 %v549
        %v901 = vunpack.c.l.b16 %v559
        %v902 = vunpack.c.l.b16 %v573
        %v903 = vunpack.c.l.b16 %v583
        %v904 = vunpack.c.l.b16 %v597
        %v905 = vunpack.c.l.b16 %v607
        %v906 = vunpack.c.l.b16 %v621
        %v907 = vunpack.c.l.b16 %v631
        %v908 = vunpack.c.l.b16 %v645
        %v909 = vunpack.c.l.b16 %v655
        %v910 = vunpack.c.l.b16 %v669
        %v911 = vunpack.c.l.b16 %v679
        %v912 = vunpack.c.l.b16 %v693
        %v913 = vunpack.c.l.b16 %v703
        %v914 = vunpack.c.l.b16 %v717
        %v915 = vunpack.c.l.b16 %v727
        %v916 = vunpack.c.l.b16 %v741
        %v917 = vunpack.c.l.b16 %v751
        %v918 = vunpack.c.l.b16 %v765
        %v919 = vunpack.c.l.b16 %v775
        %v920 = vunpack.c.l.b16 %v789
        %v921 = vunpack.c.l.b16 %v799
        %v922 = vunpack.c.l.b16 %v813
        %v923 = vunpack.c.l.b16 %v823
        %v924 = vunpack.c.l.b16 %v837
        %v925 = vunpack.c.l.b16 %v847
        %v926 = vunpack.c.l.b16 %v861
        %v927 = vunpack.c.l.b16 %v871
        %v928 = vunpack.c.l.b16 %v885
        %v929 = vunpack.c.l.b16 %v895
        %v930 = vpack.c.b16 %v899, %v898
        %v931 = vpack.c.b16 %v901, %v900
        %v932 = vpack.c.b16 %v903, %v902
        %v933 = vpack.c.b16 %v905, %v904
        %v934 = vpack.c.b16 %v907, %v906
        %v935 = vpack.c.b16 %v909, %v908
        %v936 = vpack.c.b16 %v911, %v910
        %v937 = vpack.c.b16 %v913, %v912
        %v938 = vpack.c.b16 %v915, %v914
        %v939 = vpack.c.b16 %v917, %v916
        %v940 = vpack.c.b16 %v919, %v918
        %v941 = vpack.c.b16 %v921, %v920
        %v942 = vpack.c.b16 %v923, %v922
        %v943 = vpack.c.b16 %v925, %v924
        %v944 = vpack.c.b16 %v927, %v926
        %v945 = vpack.c.b16 %v929, %v928
        %v947 = vsel %vm308, %v897, 0
        %v950 = vsel %vm308, %v930, 0
        %v953 = vsel %vm308, %v931, 0
        %v956 = vsel %vm308, %v932, 0
        %v959 = vsel %vm308, %v933, 0
        %v962 = vsel %vm308, %v934, 0
        %v965 = vsel %vm308, %v935, 0
        %v968 = vsel %vm308, %v936, 0
        %v971 = vsel %vm308, %v937, 0
        %v974 = vsel %vm308, %v938, 0
        %v977 = vsel %vm308, %v939, 0
        %v980 = vsel %vm308, %v940, 0
        %v983 = vsel %vm308, %v941, 0
        %v986 = vsel %vm308, %v942, 0
        %v989 = vsel %vm308, %v943, 0
        %v992 = vsel %vm308, %v944, 0
        %v995 = vsel %vm308, %v945, 0
        %997 = vmatprep.subr.bf16.mxu0 0
        %998 = vmatpush1.bf16.xpose.msra.mxu0 %v950
        %999 = vmatprep.subr.bf16.mxu0 0
        %1000 = vmatpush1.bf16.xpose.msra.mxu0 %v953
        %1001 = vmatprep.subr.bf16.mxu0 0
        %1002 = vmatpush1.bf16.xpose.msra.mxu0 %v956
        %1003 = vmatprep.subr.bf16.mxu0 0
        %1004 = vmatpush1.bf16.xpose.msra.mxu0 %v959
        %1005 = vmatprep.subr.bf16.mxu0 0
        %1006 = vmatpush1.bf16.xpose.msra.mxu0 %v962
        %1007 = vmatprep.subr.bf16.mxu0 0
        %1008 = vmatpush1.bf16.xpose.msra.mxu0 %v965
        %1009 = vmatprep.subr.bf16.mxu0 0
        %1010 = vmatpush1.bf16.xpose.msra.mxu0 %v968
        %1011 = vmatprep.subr.bf16.mxu0 0
        %1012 = vmatpush1.bf16.xpose.msra.mxu0 %v971
        %1013 = vmatprep.subr.bf16.mxu0 0
        %1014 = vmatpush1.bf16.xpose.msra.mxu0 %v974
        %1015 = vmatprep.subr.bf16.mxu0 0
        %1016 = vmatpush1.bf16.xpose.msra.mxu0 %v977
        %1017 = vmatprep.subr.bf16.mxu0 0
        %1018 = vmatpush1.bf16.xpose.msra.mxu0 %v980
        %1019 = vmatprep.subr.bf16.mxu0 0
        %1020 = vmatpush1.bf16.xpose.msra.mxu0 %v983
        %1021 = vmatprep.subr.bf16.mxu0 0
        %1022 = vmatpush1.bf16.xpose.msra.mxu0 %v986
        %1023 = vmatprep.subr.bf16.mxu0 0
        %1024 = vmatpush1.bf16.xpose.msra.mxu0 %v989
        %1025 = vmatprep.subr.bf16.mxu0 0
        %1026 = vmatpush1.bf16.xpose.msra.mxu0 %v992
        %1027 = vmatprep.subr.bf16.mxu0 0
        %1028 = vmatpush1.bf16.xpose.msra.mxu0 %v995
        %1029 = vmatprep.mubr.bf16.mxu0 0
        %1030 = vmatmul.mubr.bf16.gmra.mrb[0].mxu0 %v947
        %v1031 = vpop.f32.mrb[0].mxu0
        %v1032 = vadd.f32 0.0, %v1031
        %v1033 = vpop.f32.mrb[0].mxu0
        %v1034 = vadd.f32 0.0, %v1033
        %v1035 = vpop.f32.mrb[0].mxu0
        %v1036 = vpop.f32.mrb[0].mxu0
        %1037 = vdwg.mxu0
        %v1038 = vadd.f32 %v507, %v1032
        %v1039 = vadd.f32 %v508, %v1034
        %v1041 = vshrl.u32 %v219, 16
        %v1043 = vrot.slane %v1041, 4
        %v1044 = vshll.u32 %v219, 16
        %v1046 = vrot.slane %v1044, 5
        %v1047 = vor.u32 %v1043, %v1046
        %v1048 = vrot.slane %v1047, 4
        %v1050 = vshll.u32 %v220, 16
        %v1052 = vrot.slane %v1050, 5
        %v1053 = vsel %vm511, %v1048, %v1052
        %v1054 = vshrl.u32 %v220, 16
        %v1056 = vrot.slane %v1054, 4
        %v1057 = vor.u32 %v1056, %v1052
        %v1058 = vrot.slane %v1057, 4
        %v1060 = vshll.u32 %v221, 16
        %v1062 = vrot.slane %v1060, 5
        %v1063 = vsel %vm511, %v1058, %v1062
        %s1064 = scalar_lea.vmem %s1, 16
        %v1065 = vld [vmem:[%s1064] sm:$0xf]
        %v1066 = vunpack.c.l.b16 %v1053
        %v1067 = vunpack.c.l.b16 %v1063
        %v1068 = vpack.c.b16 %v1067, %v1066
        %v1070 = vsel %vm308, %v1065, 0
        %v1073 = vsel %vm308, %v1068, 0
        %1075 = vmatprep.subr.bf16.mxu0 0
        %1076 = vmatpush1.bf16.xpose.msra.mxu0 %v953
        %1077 = vmatprep.subr.bf16.mxu0 0
        %1078 = vmatpush1.bf16.xpose.msra.mxu0 %v956
        %1079 = vmatprep.subr.bf16.mxu0 0
        %1080 = vmatpush1.bf16.xpose.msra.mxu0 %v959
        %1081 = vmatprep.subr.bf16.mxu0 0
        %1082 = vmatpush1.bf16.xpose.msra.mxu0 %v962
        %1083 = vmatprep.subr.bf16.mxu0 0
        %1084 = vmatpush1.bf16.xpose.msra.mxu0 %v965
        %1085 = vmatprep.subr.bf16.mxu0 0
        %1086 = vmatpush1.bf16.xpose.msra.mxu0 %v968
        %1087 = vmatprep.subr.bf16.mxu0 0
        %1088 = vmatpush1.bf16.xpose.msra.mxu0 %v971
        %1089 = vmatprep.subr.bf16.mxu0 0
        %1090 = vmatpush1.bf16.xpose.msra.mxu0 %v974
        %1091 = vmatprep.subr.bf16.mxu0 0
        %1092 = vmatpush1.bf16.xpose.msra.mxu0 %v977
        %1093 = vmatprep.subr.bf16.mxu0 0
        %1094 = vmatpush1.bf16.xpose.msra.mxu0 %v980
        %1095 = vmatprep.subr.bf16.mxu0 0
        %1096 = vmatpush1.bf16.xpose.msra.mxu0 %v983
        %1097 = vmatprep.subr.bf16.mxu0 0
        %1098 = vmatpush1.bf16.xpose.msra.mxu0 %v986
        %1099 = vmatprep.subr.bf16.mxu0 0
        %1100 = vmatpush1.bf16.xpose.msra.mxu0 %v989
        %1101 = vmatprep.subr.bf16.mxu0 0
        %1102 = vmatpush1.bf16.xpose.msra.mxu0 %v992
        %1103 = vmatprep.subr.bf16.mxu0 0
        %1104 = vmatpush1.bf16.xpose.msra.mxu0 %v995
        %1105 = vmatprep.subr.bf16.mxu0 0
        %1106 = vmatpush1.bf16.xpose.msra.mxu0 %v1073
        %1107 = vmatprep.mubr.bf16.mxu0 0
        %1108 = vmatmul.mubr.bf16.gmra.mrb[0].mxu0 %v1070
        %v1109 = vpop.f32.mrb[0].mxu0
        %v1110 = vadd.f32 0.0, %v1109
        %v1111 = vpop.f32.mrb[0].mxu0
        %v1112 = vadd.f32 0.0, %v1111
        %v1113 = vpop.f32.mrb[0].mxu0
        %v1114 = vpop.f32.mrb[0].mxu0
        %1115 = vdwg.mxu0
        %v1116 = vadd.f32 %v1038, %v1110
        %v1117 = vadd.f32 %v1039, %v1112
        %v1119 = vshrl.u32 %v222, 16
        %v1121 = vrot.slane %v1119, 4
        %v1122 = vshll.u32 %v222, 16
        %v1124 = vrot.slane %v1122, 5
        %v1125 = vor.u32 %v1121, %v1124
        %v1126 = vrot.slane %v1125, 4
        %v1128 = vshll.u32 %v223, 16
        %v1130 = vrot.slane %v1128, 5
        %v1131 = vsel %vm511, %v1126, %v1130
        %v1132 = vshrl.u32 %v223, 16
        %v1134 = vrot.slane %v1132, 4
        %v1135 = vor.u32 %v1134, %v1130
        %v1136 = vrot.slane %v1135, 4
        %v1138 = vshll.u32 %v224, 16
        %v1140 = vrot.slane %v1138, 5
        %v1141 = vsel %vm511, %v1136, %v1140
        %s1142 = scalar_lea.vmem %s1, 28
        %v1143 = vld [vmem:[%s1142] sm:$0xf]
        %v1144 = vunpack.c.l.b16 %v1131
        %v1145 = vunpack.c.l.b16 %v1141
        %v1146 = vpack.c.b16 %v1145, %v1144
        %v1148 = vsel %vm308, %v1143, 0
        %v1151 = vsel %vm308, %v1146, 0
        %1153 = vmatprep.subr.bf16.mxu0 0
        %1154 = vmatpush1.bf16.xpose.msra.mxu0 %v956
        %1155 = vmatprep.subr.bf16.mxu0 0
        %1156 = vmatpush1.bf16.xpose.msra.mxu0 %v959
        %1157 = vmatprep.subr.bf16.mxu0 0
        %1158 = vmatpush1.bf16.xpose.msra.mxu0 %v962
        %1159 = vmatprep.subr.bf16.mxu0 0
        %1160 = vmatpush1.bf16.xpose.msra.mxu0 %v965
        %1161 = vmatprep.subr.bf16.mxu0 0
        %1162 = vmatpush1.bf16.xpose.msra.mxu0 %v968
        %1163 = vmatprep.subr.bf16.mxu0 0
        %1164 = vmatpush1.bf16.xpose.msra.mxu0 %v971
        %1165 = vmatprep.subr.bf16.mxu0 0
        %1166 = vmatpush1.bf16.xpose.msra.mxu0 %v974
        %1167 = vmatprep.subr.bf16.mxu0 0
        %1168 = vmatpush1.bf16.xpose.msra.mxu0 %v977
        %1169 = vmatprep.subr.bf16.mxu0 0
        %1170 = vmatpush1.bf16.xpose.msra.mxu0 %v980
        %1171 = vmatprep.subr.bf16.mxu0 0
        %1172 = vmatpush1.bf16.xpose.msra.mxu0 %v983
        %1173 = vmatprep.subr.bf16.mxu0 0
        %1174 = vmatpush1.bf16.xpose.msra.mxu0 %v986
        %1175 = vmatprep.subr.bf16.mxu0 0
        %1176 = vmatpush1.bf16.xpose.msra.mxu0 %v989
        %1177 = vmatprep.subr.bf16.mxu0 0
        %1178 = vmatpush1.bf16.xpose.msra.mxu0 %v992
        %1179 = vmatprep.subr.bf16.mxu0 0
        %1180 = vmatpush1.bf16.xpose.msra.mxu0 %v995
        %1181 = vmatprep.subr.bf16.mxu0 0
        %1182 = vmatpush1.bf16.xpose.msra.mxu0 %v1073
        %1183 = vmatprep.subr.bf16.mxu0 0
        %1184 = vmatpush1.bf16.xpose.msra.mxu0 %v1151
        %1185 = vmatprep.mubr.bf16.mxu0 0
        %1186 = vmatmul.mubr.bf16.gmra.mrb[0].mxu0 %v1148
        %v1187 = vpop.f32.mrb[0].mxu0
        %v1188 = vadd.f32 0.0, %v1187
        %v1189 = vpop.f32.mrb[0].mxu0
        %v1190 = vadd.f32 0.0, %v1189
        %v1191 = vpop.f32.mrb[0].mxu0
        %v1192 = vpop.f32.mrb[0].mxu0
        %1193 = vdwg.mxu0
        %v1194 = vadd.f32 %v1116, %v1188
        %v1195 = vadd.f32 %v1117, %v1190
        %vm1212 = vcmask 1042432
        %vm1213 = vcmask 1046532
        %vm1214 = vmor %vm1212, %vm1213
        %v1215 = vrot.slane %v171, 5
        %v1216 = vrot.slane %v1215, 4
        %v1217 = vrot.slane %v172, 5
        %v1218 = vsel %vm1214, %v1216, %v1217
        %v1219 = vrot.slane %v1217, 4
        %v1220 = vrot.slane %v173, 5
        %v1221 = vsel %vm1214, %v1219, %v1220
        %v1222 = vrot.slane %v174, 5
        %v1223 = vrot.slane %v1222, 4
        %v1224 = vrot.slane %v175, 5
        %v1225 = vsel %vm1214, %v1223, %v1224
        %v1226 = vrot.slane %v1224, 4
        %v1227 = vrot.slane %v176, 5
        %v1228 = vsel %vm1214, %v1226, %v1227
        %v1229 = vrot.slane %v177, 5
        %v1230 = vrot.slane %v1229, 4
        %v1231 = vrot.slane %v178, 5
        %v1232 = vsel %vm1214, %v1230, %v1231
        %v1233 = vrot.slane %v1231, 4
        %v1234 = vrot.slane %v179, 5
        %v1235 = vsel %vm1214, %v1233, %v1234
        %v1236 = vrot.slane %v180, 5
        %v1237 = vrot.slane %v1236, 4
        %v1238 = vrot.slane %v181, 5
        %v1239 = vsel %vm1214, %v1237, %v1238
        %v1240 = vrot.slane %v1238, 4
        %v1241 = vrot.slane %v182, 5
        %v1242 = vsel %vm1214, %v1240, %v1241
        %v1243 = vrot.slane %v183, 5
        %v1244 = vrot.slane %v1243, 4
        %v1245 = vrot.slane %v184, 5
        %v1246 = vsel %vm1214, %v1244, %v1245
        %v1247 = vrot.slane %v1245, 4
        %v1248 = vrot.slane %v185, 5
        %v1249 = vsel %vm1214, %v1247, %v1248
        %v1250 = vrot.slane %v186, 5
        %v1251 = vrot.slane %v1250, 4
        %v1252 = vrot.slane %v187, 5
        %v1253 = vsel %vm1214, %v1251, %v1252
        %v1254 = vrot.slane %v1252, 4
        %v1255 = vrot.slane %v188, 5
        %v1256 = vsel %vm1214, %v1254, %v1255
        %v1257 = vrot.slane %v189, 5
        %v1258 = vrot.slane %v1257, 4
        %v1259 = vrot.slane %v190, 5
        %v1260 = vsel %vm1214, %v1258, %v1259
        %v1261 = vrot.slane %v1259, 4
        %v1262 = vrot.slane %v191, 5
        %v1263 = vsel %vm1214, %v1261, %v1262
        %v1264 = vrot.slane %v192, 5
        %v1265 = vrot.slane %v1264, 4
        %v1266 = vrot.slane %v193, 5
        %v1267 = vsel %vm1214, %v1265, %v1266
        %v1268 = vrot.slane %v1266, 4
        %v1269 = vrot.slane %v194, 5
        %v1270 = vsel %vm1214, %v1268, %v1269
        %v1271 = vrot.slane %v195, 5
        %v1272 = vrot.slane %v1271, 4
        %v1273 = vrot.slane %v196, 5
        %v1274 = vsel %vm1214, %v1272, %v1273
        %v1275 = vrot.slane %v1273, 4
        %v1276 = vrot.slane %v197, 5
        %v1277 = vsel %vm1214, %v1275, %v1276
        %v1278 = vrot.slane %v198, 5
        %v1279 = vrot.slane %v1278, 4
        %v1280 = vrot.slane %v199, 5
        %v1281 = vsel %vm1214, %v1279, %v1280
        %v1282 = vrot.slane %v1280, 4
        %v1283 = vrot.slane %v200, 5
        %v1284 = vsel %vm1214, %v1282, %v1283
        %v1285 = vrot.slane %v201, 5
        %v1286 = vrot.slane %v1285, 4
        %v1287 = vrot.slane %v202, 5
        %v1288 = vsel %vm1214, %v1286, %v1287
        %v1289 = vrot.slane %v1287, 4
        %v1290 = vrot.slane %v203, 5
        %v1291 = vsel %vm1214, %v1289, %v1290
        %v1292 = vrot.slane %v204, 5
        %v1293 = vrot.slane %v1292, 4
        %v1294 = vrot.slane %v205, 5
        %v1295 = vsel %vm1214, %v1293, %v1294
        %v1296 = vrot.slane %v1294, 4
        %v1297 = vrot.slane %v206, 5
        %v1298 = vsel %vm1214, %v1296, %v1297
        %v1299 = vrot.slane %v207, 5
        %v1300 = vrot.slane %v1299, 4
        %v1301 = vrot.slane %v208, 5
        %v1302 = vsel %vm1214, %v1300, %v1301
        %v1303 = vrot.slane %v1301, 4
        %v1304 = vrot.slane %v209, 5
        %v1305 = vsel %vm1214, %v1303, %v1304
        %v1306 = vrot.slane %v210, 5
        %v1307 = vrot.slane %v1306, 4
        %v1308 = vrot.slane %v211, 5
        %v1309 = vsel %vm1214, %v1307, %v1308
        %v1310 = vrot.slane %v1308, 4
        %v1311 = vrot.slane %v212, 5
        %v1312 = vsel %vm1214, %v1310, %v1311
        %v1313 = vrot.slane %v213, 5
        %v1314 = vrot.slane %v1313, 4
        %v1315 = vrot.slane %v214, 5
        %v1316 = vsel %vm1214, %v1314, %v1315
        %v1317 = vrot.slane %v1315, 4
        %v1318 = vrot.slane %v215, 5
        %v1319 = vsel %vm1214, %v1317, %v1318
        %v1320 = vrot.slane %v216, 5
        %v1321 = vrot.slane %v1320, 4
        %v1322 = vrot.slane %v217, 5
        %v1323 = vsel %vm1214, %v1321, %v1322
        %v1324 = vrot.slane %v1322, 4
        %v1325 = vrot.slane %v218, 5
        %v1326 = vsel %vm1214, %v1324, %v1325
        %s1327 = scalar_lea.vmem %s1, 8
        %v1328 = vld [vmem:[%s1327] sm:$0xf]
        %v1329 = vunpack.c.l.b16 %v1218
        %v1330 = vunpack.c.l.b16 %v1221
        %v1331 = vunpack.c.l.b16 %v1225
        %v1332 = vunpack.c.l.b16 %v1228
        %v1333 = vunpack.c.l.b16 %v1232
        %v1334 = vunpack.c.l.b16 %v1235
        %v1335 = vunpack.c.l.b16 %v1239
        %v1336 = vunpack.c.l.b16 %v1242
        %v1337 = vunpack.c.l.b16 %v1246
        %v1338 = vunpack.c.l.b16 %v1249
        %v1339 = vunpack.c.l.b16 %v1253
        %v1340 = vunpack.c.l.b16 %v1256
        %v1341 = vunpack.c.l.b16 %v1260
        %v1342 = vunpack.c.l.b16 %v1263
        %v1343 = vunpack.c.l.b16 %v1267
        %v1344 = vunpack.c.l.b16 %v1270
        %v1345 = vunpack.c.l.b16 %v1274
        %v1346 = vunpack.c.l.b16 %v1277
        %v1347 = vunpack.c.l.b16 %v1281
        %v1348 = vunpack.c.l.b16 %v1284
        %v1349 = vunpack.c.l.b16 %v1288
        %v1350 = vunpack.c.l.b16 %v1291
        %v1351 = vunpack.c.l.b16 %v1295
        %v1352 = vunpack.c.l.b16 %v1298
        %v1353 = vunpack.c.l.b16 %v1302
        %v1354 = vunpack.c.l.b16 %v1305
        %v1355 = vunpack.c.l.b16 %v1309
        %v1356 = vunpack.c.l.b16 %v1312
        %v1357 = vunpack.c.l.b16 %v1316
        %v1358 = vunpack.c.l.b16 %v1319
        %v1359 = vunpack.c.l.b16 %v1323
        %v1360 = vunpack.c.l.b16 %v1326
        %v1361 = vpack.c.b16 %v1330, %v1329
        %v1362 = vpack.c.b16 %v1332, %v1331
        %v1363 = vpack.c.b16 %v1334, %v1333
        %v1364 = vpack.c.b16 %v1336, %v1335
        %v1365 = vpack.c.b16 %v1338, %v1337
        %v1366 = vpack.c.b16 %v1340, %v1339
        %v1367 = vpack.c.b16 %v1342, %v1341
        %v1368 = vpack.c.b16 %v1344, %v1343
        %v1369 = vpack.c.b16 %v1346, %v1345
        %v1370 = vpack.c.b16 %v1348, %v1347
        %v1371 = vpack.c.b16 %v1350, %v1349
        %v1372 = vpack.c.b16 %v1352, %v1351
        %v1373 = vpack.c.b16 %v1354, %v1353
        %v1374 = vpack.c.b16 %v1356, %v1355
        %v1375 = vpack.c.b16 %v1358, %v1357
        %v1376 = vpack.c.b16 %v1360, %v1359
        %v1378 = vsel %vm308, %v1328, 0
        %v1381 = vsel %vm308, %v1361, 0
        %v1384 = vsel %vm308, %v1362, 0
        %v1387 = vsel %vm308, %v1363, 0
        %v1390 = vsel %vm308, %v1364, 0
        %v1393 = vsel %vm308, %v1365, 0
        %v1396 = vsel %vm308, %v1366, 0
        %v1399 = vsel %vm308, %v1367, 0
        %v1402 = vsel %vm308, %v1368, 0
        %v1405 = vsel %vm308, %v1369, 0
        %v1408 = vsel %vm308, %v1370, 0
        %v1411 = vsel %vm308, %v1371, 0
        %v1414 = vsel %vm308, %v1372, 0
        %v1417 = vsel %vm308, %v1373, 0
        %v1420 = vsel %vm308, %v1374, 0
        %v1423 = vsel %vm308, %v1375, 0
        %v1426 = vsel %vm308, %v1376, 0
        %1428 = vmatprep.subr.bf16.mxu0 0
        %1429 = vmatpush1.bf16.xpose.msra.mxu0 %v1381
        %1430 = vmatprep.subr.bf16.mxu0 0
        %1431 = vmatpush1.bf16.xpose.msra.mxu0 %v1384
        %1432 = vmatprep.subr.bf16.mxu0 0
        %1433 = vmatpush1.bf16.xpose.msra.mxu0 %v1387
        %1434 = vmatprep.subr.bf16.mxu0 0
        %1435 = vmatpush1.bf16.xpose.msra.mxu0 %v1390
        %1436 = vmatprep.subr.bf16.mxu0 0
        %1437 = vmatpush1.bf16.xpose.msra.mxu0 %v1393
        %1438 = vmatprep.subr.bf16.mxu0 0
        %1439 = vmatpush1.bf16.xpose.msra.mxu0 %v1396
        %1440 = vmatprep.subr.bf16.mxu0 0
        %1441 = vmatpush1.bf16.xpose.msra.mxu0 %v1399
        %1442 = vmatprep.subr.bf16.mxu0 0
        %1443 = vmatpush1.bf16.xpose.msra.mxu0 %v1402
        %1444 = vmatprep.subr.bf16.mxu0 0
        %1445 = vmatpush1.bf16.xpose.msra.mxu0 %v1405
        %1446 = vmatprep.subr.bf16.mxu0 0
        %1447 = vmatpush1.bf16.xpose.msra.mxu0 %v1408
        %1448 = vmatprep.subr.bf16.mxu0 0
        %1449 = vmatpush1.bf16.xpose.msra.mxu0 %v1411
        %1450 = vmatprep.subr.bf16.mxu0 0
        %1451 = vmatpush1.bf16.xpose.msra.mxu0 %v1414
        %1452 = vmatprep.subr.bf16.mxu0 0
        %1453 = vmatpush1.bf16.xpose.msra.mxu0 %v1417
        %1454 = vmatprep.subr.bf16.mxu0 0
        %1455 = vmatpush1.bf16.xpose.msra.mxu0 %v1420
        %1456 = vmatprep.subr.bf16.mxu0 0
        %1457 = vmatpush1.bf16.xpose.msra.mxu0 %v1423
        %1458 = vmatprep.subr.bf16.mxu0 0
        %1459 = vmatpush1.bf16.xpose.msra.mxu0 %v1426
        %1460 = vmatprep.mubr.bf16.mxu0 0
        %1461 = vmatmul.mubr.bf16.gmra.mrb[0].mxu0 %v1378
        %v1462 = vpop.f32.mrb[0].mxu0
        %v1463 = vadd.f32 0.0, %v1462
        %v1464 = vpop.f32.mrb[0].mxu0
        %v1465 = vadd.f32 0.0, %v1464
        %v1466 = vpop.f32.mrb[0].mxu0
        %v1467 = vpop.f32.mrb[0].mxu0
        %1468 = vdwg.mxu0
        %v1469 = vadd.f32 %v1194, %v1463
        %v1470 = vadd.f32 %v1195, %v1465
        %v1472 = vrot.slane %v219, 5
        %v1473 = vrot.slane %v1472, 4
        %v1474 = vrot.slane %v220, 5
        %v1475 = vsel %vm1214, %v1473, %v1474
        %v1476 = vrot.slane %v1474, 4
        %v1477 = vrot.slane %v221, 5
        %v1478 = vsel %vm1214, %v1476, %v1477
        %s1479 = scalar_lea.vmem %s1, 20
        %v1480 = vld [vmem:[%s1479] sm:$0xf]
        %v1481 = vunpack.c.l.b16 %v1475
        %v1482 = vunpack.c.l.b16 %v1478
        %v1483 = vpack.c.b16 %v1482, %v1481
        %v1485 = vsel %vm308, %v1480, 0
        %v1488 = vsel %vm308, %v1483, 0
        %1490 = vmatprep.subr.bf16.mxu0 0
        %1491 = vmatpush1.bf16.xpose.msra.mxu0 %v1384
        %1492 = vmatprep.subr.bf16.mxu0 0
        %1493 = vmatpush1.bf16.xpose.msra.mxu0 %v1387
        %1494 = vmatprep.subr.bf16.mxu0 0
        %1495 = vmatpush1.bf16.xpose.msra.mxu0 %v1390
        %1496 = vmatprep.subr.bf16.mxu0 0
        %1497 = vmatpush1.bf16.xpose.msra.mxu0 %v1393
        %1498 = vmatprep.subr.bf16.mxu0 0
        %1499 = vmatpush1.bf16.xpose.msra.mxu0 %v1396
        %1500 = vmatprep.subr.bf16.mxu0 0
        %1501 = vmatpush1.bf16.xpose.msra.mxu0 %v1399
        %1502 = vmatprep.subr.bf16.mxu0 0
        %1503 = vmatpush1.bf16.xpose.msra.mxu0 %v1402
        %1504 = vmatprep.subr.bf16.mxu0 0
        %1505 = vmatpush1.bf16.xpose.msra.mxu0 %v1405
        %1506 = vmatprep.subr.bf16.mxu0 0
        %1507 = vmatpush1.bf16.xpose.msra.mxu0 %v1408
        %1508 = vmatprep.subr.bf16.mxu0 0
        %1509 = vmatpush1.bf16.xpose.msra.mxu0 %v1411
        %1510 = vmatprep.subr.bf16.mxu0 0
        %1511 = vmatpush1.bf16.xpose.msra.mxu0 %v1414
        %1512 = vmatprep.subr.bf16.mxu0 0
        %1513 = vmatpush1.bf16.xpose.msra.mxu0 %v1417
        %1514 = vmatprep.subr.bf16.mxu0 0
        %1515 = vmatpush1.bf16.xpose.msra.mxu0 %v1420
        %1516 = vmatprep.subr.bf16.mxu0 0
        %1517 = vmatpush1.bf16.xpose.msra.mxu0 %v1423
        %1518 = vmatprep.subr.bf16.mxu0 0
        %1519 = vmatpush1.bf16.xpose.msra.mxu0 %v1426
        %1520 = vmatprep.subr.bf16.mxu0 0
        %1521 = vmatpush1.bf16.xpose.msra.mxu0 %v1488
        %1522 = vmatprep.mubr.bf16.mxu0 0
        %1523 = vmatmul.mubr.bf16.gmra.mrb[0].mxu0 %v1485
        %v1524 = vpop.f32.mrb[0].mxu0
        %v1525 = vadd.f32 0.0, %v1524
        %v1526 = vpop.f32.mrb[0].mxu0
        %v1527 = vadd.f32 0.0, %v1526
        %v1528 = vpop.f32.mrb[0].mxu0
        %v1529 = vpop.f32.mrb[0].mxu0
        %1530 = vdwg.mxu0
        %v1531 = vadd.f32 %v1469, %v1525
        %v1532 = vadd.f32 %v1470, %v1527
        %v1534 = vrot.slane %v222, 5
        %v1535 = vrot.slane %v1534, 4
        %v1536 = vrot.slane %v223, 5
        %v1537 = vsel %vm1214, %v1535, %v1536
        %v1538 = vrot.slane %v1536, 4
        %v1539 = vrot.slane %v224, 5
        %v1540 = vsel %vm1214, %v1538, %v1539
        %s1541 = scalar_lea.vmem %s1, 32
        %v1542 = vld [vmem:[%s1541] sm:$0xf]
        %v1543 = vunpack.c.l.b16 %v1537
        %v1544 = vunpack.c.l.b16 %v1540
        %v1545 = vpack.c.b16 %v1544, %v1543
        %v1547 = vsel %vm308, %v1542, 0
        %v1550 = vsel %vm308, %v1545, 0
        %1552 = vmatprep.subr.bf16.mxu0 0
        %1553 = vmatpush1.bf16.xpose.msra.mxu0 %v1387
        %1554 = vmatprep.subr.bf16.mxu0 0
        %1555 = vmatpush1.bf16.xpose.msra.mxu0 %v1390
        %1556 = vmatprep.subr.bf16.mxu0 0
        %1557 = vmatpush1.bf16.xpose.msra.mxu0 %v1393
        %1558 = vmatprep.subr.bf16.mxu0 0
        %1559 = vmatpush1.bf16.xpose.msra.mxu0 %v1396
        %1560 = vmatprep.subr.bf16.mxu0 0
        %1561 = vmatpush1.bf16.xpose.msra.mxu0 %v1399
        %1562 = vmatprep.subr.bf16.mxu0 0
        %1563 = vmatpush1.bf16.xpose.msra.mxu0 %v1402
        %1564 = vmatprep.subr.bf16.mxu0 0
        %1565 = vmatpush1.bf16.xpose.msra.mxu0 %v1405
        %1566 = vmatprep.subr.bf16.mxu0 0
        %1567 = vmatpush1.bf16.xpose.msra.mxu0 %v1408
        %1568 = vmatprep.subr.bf16.mxu0 0
        %1569 = vmatpush1.bf16.xpose.msra.mxu0 %v1411
        %1570 = vmatprep.subr.bf16.mxu0 0
        %1571 = vmatpush1.bf16.xpose.msra.mxu0 %v1414
        %1572 = vmatprep.subr.bf16.mxu0 0
        %1573 = vmatpush1.bf16.xpose.msra.mxu0 %v1417
        %1574 = vmatprep.subr.bf16.mxu0 0
        %1575 = vmatpush1.bf16.xpose.msra.mxu0 %v1420
        %1576 = vmatprep.subr.bf16.mxu0 0
        %1577 = vmatpush1.bf16.xpose.msra.mxu0 %v1423
        %1578 = vmatprep.subr.bf16.mxu0 0
        %1579 = vmatpush1.bf16.xpose.msra.mxu0 %v1426
        %1580 = vmatprep.subr.bf16.mxu0 0
        %1581 = vmatpush1.bf16.xpose.msra.mxu0 %v1488
        %1582 = vmatprep.subr.bf16.mxu0 0
        %1583 = vmatpush1.bf16.xpose.msra.mxu0 %v1550
        %1584 = vmatprep.mubr.bf16.mxu0 0
        %1585 = vmatmul.mubr.bf16.gmra.mrb[0].mxu0 %v1547
        %v1586 = vpop.f32.mrb[0].mxu0
        %v1587 = vadd.f32 0.0, %v1586
        %v1588 = vpop.f32.mrb[0].mxu0
        %v1589 = vadd.f32 0.0, %v1588
        %v1590 = vpop.f32.mrb[0].mxu0
        %v1591 = vpop.f32.mrb[0].mxu0
        %1592 = vdwg.mxu0
        %v1593 = vadd.f32 %v1531, %v1587
        %v1594 = vadd.f32 %v1532, %v1589
        %1596 = vset.pattern.permute.xlu0 0
        %1597 = vperm.xlu0 %1596, %v170
        %v1598 = vpop.permute.xlu0 %1597
        %v1600 = vadd.f32 %v1593, %v1598
        %v1601 = vadd.f32 %v1594, %v1598
        %v1602 = vmax.f32 %v1600, 0.0
        %v1603 = vmax.f32 %v1601, 0.0
        %v1604 = vpack.c.bf16 %v1602, %v1602
        %v1605 = vpack.c.bf16 %v1603, %v1603
        %v1608 = vunpack.c.l.b16 %v1604
        %v1609 = vunpack.c.l.b16 %v1605
        %v1610 = vpack.c.b16 %v1609, %v1608
        %1612 = vst [vmem:[%s163] sm:$0xff] %v1610
        %s1613 = sand.u32 %s93, 1
        %s1614 = scalar_lea.sflag [#allocation3], %s1613
        %s1615 = sand.u32 %s93, 1
        %s1616 = smul.addr %s1615, 8
        %s1617 = scalar_lea.vmem [#allocation2], %s1616
        // Predicated region
        $region33: #{tpu_custom_call.1} parent=31 // pred_check
          %p1618 = pneg %p103
        $region34: #{tpu_custom_call.1} parent=31 // pred_check_branch
          %1620 = sbr.rel (%p1618) target = $region36
        $region35: #{tpu_custom_call.1} parent=31 // pred_region
          %s1622 = ssub.s32 128, 128
          %1623 = vsyncadd %s1614, %s1622
          %s1624 = smul.addr %s17, 2
          %s1625 = smul.addr %s1624, 64
          %s1626 = scalar_lea.hbm %s3, %s1625
          %s1628 = sshll.u32 %s1617, 4
          %s1629 = int_to_ptr.vmem [resolvable:$true] %s1628
          %1631 = dma.vmem_to_hbm [thread:$0]  %s1629, 128, %s1626, %s1614
        $region36: #{tpu_custom_call.1} parent=31 // pred_fallthru
          _
      $region32: #{tpu_custom_call.1} parent=5 // pred_fallthru
        _
      %p1632 = scmp.le.s32.totalorder 2, %s12
      // Predicated region
      $region37: #{tpu_custom_call.1} parent=5 // pred_check
        %p1633 = pneg %p1632
      $region38: #{tpu_custom_call.1} parent=5 // pred_check_branch
        %1635 = sbr.rel (%p1633) target = $region40
      $region39: #{tpu_custom_call.1} parent=5 // pred_region
        %s1636 = ssub.s32 %s12, 2
        // Predicated region
        $region41: #{tpu_custom_call.1} parent=39 // pred_check
          %p1637 = pneg %p109
        $region42: #{tpu_custom_call.1} parent=39 // pred_check_branch
          %1639 = sbr.rel (%p1637) target = $region44
        $region43: #{tpu_custom_call.1} parent=39 // pred_region
          %s1640 = sand.u32 %s94, 1
          %s1641 = scalar_lea.sflag [#allocation3], %s1640
          %s1642 = sand.u32 %s94, 1
          %s1643 = smul.addr %s1642, 8
          %s1644 = scalar_lea.vmem [#allocation2], %s1643
          %1645 = dma.done %s1641, 128
        $region44: #{tpu_custom_call.1} parent=39 // pred_fallthru
          _
      $region40: #{tpu_custom_call.1} parent=5 // pred_fallthru
        _
    $region6: #{tpu_custom_call.1} parent=1 // loop_footer
      %s16 = sadd.s32 1, %s12
    $region7: #{tpu_custom_call.1} parent=1 // loop_footer_branch
      %11 = sbr.rel target = $region3
    $region8: #{tpu_custom_call.1} parent=1 // loop_exit
      _
    %1646 = vsyncpa [#allocation3], 1
    %s1647 = scalar_lea.sflag [#allocation3], 1
    %1648 = vsyncpa %s1647, 1

</llo_original>
